<compile_context>
chip_gen: v6e
topology: v6e:2x2x1
jax: 0.10.0
libtpu: 0.0.40
codegen_flags: <defaults>
</compile_context>

<pallas_src>
import functools
import math

import jax
import jax.numpy as jnp
from jax.experimental import pallas as pl
from jax.experimental.pallas import tpu as pltpu


# ----------------------------------------------------------------------------
# Kernel
# ----------------------------------------------------------------------------
def _make_kernel(num_heads: int, eps: float = 1e-5):
    def kernel(x_ref, bias_ref, rowmul_ref,
               wqkv_ref, bqkv_ref, wo_ref, bo_ref,
               g1_ref, be1_ref,
               w1_ref, b1_ref, w2_ref, b2_ref,
               g2_ref, be2_ref,
               o_ref):
        x = x_ref[...]                     # (BS, E) f32
        bias = bias_ref[...]               # (BS, BS) additive attention bias
        rowmul = rowmul_ref[...]           # (BS, 1)  0.0 for fully-masked rows

        E = x.shape[-1]
        H = num_heads
        Dh = E // H
        scale = jnp.float32(1.0 / math.sqrt(Dh))

        # --- fused QKV projection (one MXU pass, pre-transposed weight) -----
        qkv = jnp.dot(x, wqkv_ref[...],
                      preferred_element_type=jnp.float32) + bqkv_ref[...]  # (BS, 3E)

        wo_t = wo_ref[...]                 # (E, E) pre-transposed out-proj

        # contract last axis of both operands (q @ k^T without materializing k^T)
        dn_qkt = (((1,), (1,)), ((), ()))

        # --- per-head attention over the whole flattened batch --------------
        acc = jnp.zeros_like(x)            # (BS, E)
        for h in range(H):
            lo = h * Dh
            qh = qkv[:, lo:lo + Dh]                    # (BS, Dh)
            kh = qkv[:, E + lo:E + lo + Dh]            # (BS, Dh)
            vh = qkv[:, 2 * E + lo:2 * E + lo + Dh]    # (BS, Dh)

            s = jax.lax.dot_general(qh, kh, dn_qkt,
                                    preferred_element_type=jnp.float32)
            s = s * scale + bias                       # (BS, BS)

            m = jnp.max(s, axis=-1, keepdims=True)
            p = jnp.exp(s - m)
            inv = pl.reciprocal(jnp.sum(p, axis=-1, keepdims=True), approx=True)
            ctx = jnp.dot(p, vh, preferred_element_type=jnp.float32) * inv   # (BS, Dh)

            # fold per-head slice of the output projection into the loop
            acc = acc + jnp.dot(ctx, wo_t[lo:lo + Dh, :],
                                preferred_element_type=jnp.float32)

        # fully-masked batches get a zero MHA output (torch fallback path)
        mha = (acc + bo_ref[...]) * rowmul

        # --- residual + LayerNorm 1 -----------------------------------------
        x1 = x + mha
        mu1 = jnp.mean(x1, axis=-1, keepdims=True)
        xc1 = x1 - mu1
        var1 = jnp.mean(xc1 * xc1, axis=-1, keepdims=True)
        x1n = xc1 * jax.lax.rsqrt(var1 + eps) * g1_ref[...] + be1_ref[...]

        # --- feed-forward -----------------------------------------------------
        hid = jnp.dot(x1n, w1_ref[...],
                      preferred_element_type=jnp.float32) + b1_ref[...]
        hid = jnp.maximum(hid, 0.0)
        ff = jnp.dot(hid, w2_ref[...],
                     preferred_element_type=jnp.float32) + b2_ref[...]

        # --- residual + LayerNorm 2 -----------------------------------------
        x2 = x1n + ff
        mu2 = jnp.mean(x2, axis=-1, keepdims=True)
        xc2 = x2 - mu2
        var2 = jnp.mean(xc2 * xc2, axis=-1, keepdims=True)
        out = xc2 * jax.lax.rsqrt(var2 + eps) * g2_ref[...] + be2_ref[...]

        o_ref[...] = out.astype(o_ref.dtype)

    return kernel


# ----------------------------------------------------------------------------
# Wrapper
# ----------------------------------------------------------------------------
@functools.partial(jax.jit, static_argnames=("num_heads",))
def hand_transformer_pallas(x_hand, x_mask, params, *, num_heads):
    B, S, E = x_hand.shape
    BS = B * S

    x2d = x_hand.astype(jnp.float32).reshape(BS, E)

    # additive attention bias (BS, BS): 0 where (same batch & key not padded),
    # -1e30 otherwise.  Built once outside the kernel (layout plumbing, free).
    mask_b = x_mask.astype(jnp.bool_)                        # (B, S) True = padded
    key_pad = mask_b.reshape(BS)
    row_batch = jnp.repeat(jnp.arange(B, dtype=jnp.int32), S)
    same_batch = row_batch[:, None] == row_batch[None, :]
    allow = jnp.logical_and(same_batch, jnp.logical_not(key_pad)[None, :])
    bias = jnp.where(allow, 0.0, -1e30).astype(jnp.float32)  # (BS, BS)

    # per-row multiplier: zero MHA output for fully-masked batches (boolean
    # reduction, no float-sum trick).
    all_masked = jnp.all(mask_b, axis=1)                     # (B,)
    rowmul = jnp.where(jnp.repeat(all_masked, S), 0.0, 1.0
                       ).astype(jnp.float32)[:, None]        # (BS, 1)

    # fuse + pre-transpose weights once, outside the kernel.
    wqkv_t = jnp.concatenate(
        [params["wq"].T, params["wk"].T, params["wv"].T], axis=1)        # (E, 3E)
    bqkv = jnp.concatenate(
        [params["bq"], params["bk"], params["bv"]], axis=1)              # (1, 3E)
    wo_t = params["wo"].T                                                # (E, E)
    w1_t = params["w1"].T                                                # (E, F)
    w2_t = params["w2"].T                                                # (F, E)

    args = (x2d, bias, rowmul,
            wqkv_t, bqkv, wo_t, params["bo"],
            params["ln1_g"], params["ln1_b"],
            w1_t, params["b1"], w2_t, params["b2"],
            params["ln2_g"], params["ln2_b"])

    def full_spec(shape):
        nd = len(shape)
        return pl.BlockSpec(shape, lambda i, _n=nd: (0,) * _n)

    grid_spec = pltpu.PrefetchScalarGridSpec(
        num_scalar_prefetch=0,
        grid=(1,),                                   # single step: whole problem
        in_specs=[full_spec(a.shape) for a in args],
        out_specs=full_spec((BS, E)),
    )

    out2d = pl.pallas_call(
        _make_kernel(num_heads),
        out_shape=jax.ShapeDtypeStruct((BS, E), jnp.float32),
        grid_spec=grid_spec,
        compiler_params=pltpu.CompilerParams(
            dimension_semantics=("arbitrary",)),
    )(*args)

    return out2d.reshape(B, S, E)


# ----------------------------------------------------------------------------
# Pure-JAX reference (mirrors torch semantics) for a correctness check
# ----------------------------------------------------------------------------
def hand_transformer_ref(x_hand, x_mask, params, *, num_heads, eps=1e-5):
    B, S, E = x_hand.shape
    Dh = E // num_heads
    scale = 1.0 / math.sqrt(Dh)

    q = x_hand @ params["wq"].T + params["bq"]
    k = x_hand @ params["wk"].T + params["bk"]
    v = x_hand @ params["wv"].T + params["bv"]

    def split(t):  # (B,S,E) -> (B,H,S,Dh)
        return t.reshape(B, S, num_heads, Dh).transpose(0, 2, 1, 3)

    qh, kh, vh = split(q), split(k), split(v)
    scores = jnp.einsum("bhqd,bhkd->bhqk", qh, kh) * scale
    key_bias = x_mask.astype(jnp.float32)[:, None, None, :] * (-1e30)
    scores = scores + key_bias
    attn = jax.nn.softmax(scores, axis=-1)
    ctx = jnp.einsum("bhqk,bhkd->bhqd", attn, vh)
    ctx = ctx.transpose(0, 2, 1, 3).reshape(B, S, E)
    mha = ctx @ params["wo"].T + params["bo"]

    all_masked = jnp.all(x_mask, axis=1)                  # (B,)
    mha = jnp.where(all_masked[:, None, None], 0.0, mha)  # fallback zeros

    def ln(x, g, b):
        mu = jnp.mean(x, axis=-1, keepdims=True)
        var = jnp.mean((x - mu) ** 2, axis=-1, keepdims=True)
        return (x - mu) * jax.lax.rsqrt(var + eps) * g + b

    x1 = ln(x_hand + mha, params["ln1_g"], params["ln1_b"])
    hid = jnp.maximum(x1 @ params["w1"].T + params["b1"], 0.0)
    ff = hid @ params["w2"].T + params["b2"]
    return ln(x1 + ff, params["ln2_g"], params["ln2_b"])


# ----------------------------------------------------------------------------
# Deterministic parameter init (synthetic; shapes follow the nn.Module)
# ----------------------------------------------------------------------------
def init_params(key, embed_dim, ff_dim):
    ks = jax.random.split(key, 12)
    scale = 0.05
    return {
        "wq": jax.random.normal(ks[0], (embed_dim, embed_dim), jnp.float32) * scale,
        "wk": jax.random.normal(ks[1], (embed_dim, embed_dim), jnp.float32) * scale,
        "wv": jax.random.normal(ks[2], (embed_dim, embed_dim), jnp.float32) * scale,
        "bq": jax.random.normal(ks[3], (1, embed_dim), jnp.float32) * scale,
        "bk": jax.random.normal(ks[4], (1, embed_dim), jnp.float32) * scale,
        "bv": jax.random.normal(ks[5], (1, embed_dim), jnp.float32) * scale,
        "wo": jax.random.normal(ks[6], (embed_dim, embed_dim), jnp.float32) * scale,
        "bo": jax.random.normal(ks[7], (1, embed_dim), jnp.float32) * scale,
        "ln1_g": jnp.ones((1, embed_dim), jnp.float32),
        "ln1_b": jnp.zeros((1, embed_dim), jnp.float32),
        "w1": jax.random.normal(ks[8], (ff_dim, embed_dim), jnp.float32) * scale,
        "b1": jax.random.normal(ks[9], (1, ff_dim), jnp.float32) * scale,
        "w2": jax.random.normal(ks[10], (embed_dim, ff_dim), jnp.float32) * scale,
        "b2": jax.random.normal(ks[11], (1, embed_dim), jnp.float32) * scale,
        "ln2_g": jnp.ones((1, embed_dim), jnp.float32),
        "ln2_b": jnp.zeros((1, embed_dim), jnp.float32),
    }


if __name__ == "__main__":
    B, S, E, H, FF = 3, 8, 32, 4, 64

    key = jax.random.PRNGKey(0)
    k_x, k_p = jax.random.split(key)
    x_hand = jax.random.normal(k_x, (B, S, E), jnp.float32)

    # mask: batch 0 -> no padding, batch 1 -> half padded, batch 2 -> fully
    # padded (exercises the zero-output fallback path).
    x_mask = jnp.stack([
        jnp.zeros((S,), jnp.bool_),
        jnp.arange(S) >= S // 2,
        jnp.ones((S,), jnp.bool_),
    ], axis=0)

    params = init_params(k_p, E, FF)

    out = hand_transformer_pallas(x_hand, x_mask, params, num_heads=H)
    out = jax.block_until_ready(out)

    ref = hand_transformer_ref(x_hand, x_mask, params, num_heads=H)
    # tolerance accounts for the EUP approximate-reciprocal softmax denominator
    if not jnp.allclose(out, ref, atol=5e-3, rtol=5e-3):
        raise AssertionError(
            f"mismatch: max abs err {float(jnp.max(jnp.abs(out - ref)))}")

    print("KERNEL_OK")
</pallas_src>

<mosaic_0001>
module attributes {stable_mosaic.version = 11 : i64} {
  func.func @kernel(%arg0: i32, %arg1: memref<24x32xf32, #tpu.memory_space<vmem>>, %arg2: memref<24x24xf32, #tpu.memory_space<vmem>>, %arg3: memref<24x1xf32, #tpu.memory_space<vmem>>, %arg4: memref<32x96xf32, #tpu.memory_space<vmem>>, %arg5: memref<1x96xf32, #tpu.memory_space<vmem>>, %arg6: memref<32x32xf32, #tpu.memory_space<vmem>>, %arg7: memref<1x32xf32, #tpu.memory_space<vmem>>, %arg8: memref<1x32xf32, #tpu.memory_space<vmem>>, %arg9: memref<1x32xf32, #tpu.memory_space<vmem>>, %arg10: memref<32x64xf32, #tpu.memory_space<vmem>>, %arg11: memref<1x64xf32, #tpu.memory_space<vmem>>, %arg12: memref<64x32xf32, #tpu.memory_space<vmem>>, %arg13: memref<1x32xf32, #tpu.memory_space<vmem>>, %arg14: memref<1x32xf32, #tpu.memory_space<vmem>>, %arg15: memref<1x32xf32, #tpu.memory_space<vmem>>, %arg16: memref<24x32xf32, #tpu.memory_space<vmem>>) attributes {dimension_semantics = [#tpu.dimension_semantics<arbitrary>], iteration_bounds = array<i64: 1>, scalar_prefetch = 0 : i64, scratch_operands = 0 : i64, tpu.core_type = #tpu.core_type<tc>, window_params = [{pipeline_mode = #tpu.pipeline_mode<synchronous>, transform_indices = @transform_0, window_bounds = array<i64: 24, 32>}, {pipeline_mode = #tpu.pipeline_mode<synchronous>, transform_indices = @transform_1, window_bounds = array<i64: 24, 24>}, {pipeline_mode = #tpu.pipeline_mode<synchronous>, transform_indices = @transform_2, window_bounds = array<i64: 24, 1>}, {pipeline_mode = #tpu.pipeline_mode<synchronous>, transform_indices = @transform_3, window_bounds = array<i64: 32, 96>}, {pipeline_mode = #tpu.pipeline_mode<synchronous>, transform_indices = @transform_4, window_bounds = array<i64: 1, 96>}, {pipeline_mode = #tpu.pipeline_mode<synchronous>, transform_indices = @transform_5, window_bounds = array<i64: 32, 32>}, {pipeline_mode = #tpu.pipeline_mode<synchronous>, transform_indices = @transform_6, window_bounds = array<i64: 1, 32>}, {pipeline_mode = #tpu.pipeline_mode<synchronous>, transform_indices = @transform_7, window_bounds = array<i64: 1, 32>}, {pipeline_mode = #tpu.pipeline_mode<synchronous>, transform_indices = @transform_8, window_bounds = array<i64: 1, 32>}, {pipeline_mode = #tpu.pipeline_mode<synchronous>, transform_indices = @transform_9, window_bounds = array<i64: 32, 64>}, {pipeline_mode = #tpu.pipeline_mode<synchronous>, transform_indices = @transform_10, window_bounds = array<i64: 1, 64>}, {pipeline_mode = #tpu.pipeline_mode<synchronous>, transform_indices = @transform_11, window_bounds = array<i64: 64, 32>}, {pipeline_mode = #tpu.pipeline_mode<synchronous>, transform_indices = @transform_12, window_bounds = array<i64: 1, 32>}, {pipeline_mode = #tpu.pipeline_mode<synchronous>, transform_indices = @transform_13, window_bounds = array<i64: 1, 32>}, {pipeline_mode = #tpu.pipeline_mode<synchronous>, transform_indices = @transform_14, window_bounds = array<i64: 1, 32>}, {pipeline_mode = #tpu.pipeline_mode<synchronous>, transform_indices = @transform_15, window_bounds = array<i64: 24, 32>}]} {
    %c0 = arith.constant 0 : index
    %c0_0 = arith.constant 0 : index
    %0 = vector.load %arg1[%c0, %c0_0] : memref<24x32xf32, #tpu.memory_space<vmem>>, vector<24x32xf32>
    %c0_1 = arith.constant 0 : index
    %c0_2 = arith.constant 0 : index
    %1 = vector.load %arg2[%c0_1, %c0_2] : memref<24x24xf32, #tpu.memory_space<vmem>>, vector<24x24xf32>
    %c0_3 = arith.constant 0 : index
    %c0_4 = arith.constant 0 : index
    %2 = vector.load %arg3[%c0_3, %c0_4] : memref<24x1xf32, #tpu.memory_space<vmem>>, vector<24x1xf32>
    %c0_5 = arith.constant 0 : index
    %c0_6 = arith.constant 0 : index
    %3 = vector.load %arg4[%c0_5, %c0_6] : memref<32x96xf32, #tpu.memory_space<vmem>>, vector<32x96xf32>
    %cst = arith.constant dense<0.000000e+00> : vector<24x96xf32>
    %4 = tpu.matmul %0, %3, %cst {dimension_numbers = #tpu.dot_dimension_numbers<[1], [0], [0], [1], [0, 0, 1, 1], [], []>} : vector<24x32xf32>, vector<32x96xf32>, vector<24x96xf32> -> vector<24x96xf32>
    %c0_7 = arith.constant 0 : index
    %c0_8 = arith.constant 0 : index
    %5 = vector.load %arg5[%c0_7, %c0_8] : memref<1x96xf32, #tpu.memory_space<vmem>>, vector<1x96xf32>
    %6 = vector.broadcast %5 : vector<1x96xf32> to vector<24x96xf32>
    %7 = arith.addf %4, %6 : vector<24x96xf32>
    %c0_9 = arith.constant 0 : index
    %c0_10 = arith.constant 0 : index
    %8 = vector.load %arg6[%c0_9, %c0_10] : memref<32x32xf32, #tpu.memory_space<vmem>>, vector<32x32xf32>
    %cst_11 = arith.constant 0.000000e+00 : f32
    %9 = vector.broadcast %cst_11 : f32 to vector<24x32xf32>
    %10 = vector.extract_strided_slice %7 {offsets = [0, 0], sizes = [24, 8], strides = [1, 1]} : vector<24x96xf32> to vector<24x8xf32>
    %11 = vector.extract_strided_slice %7 {offsets = [0, 32], sizes = [24, 8], strides = [1, 1]} : vector<24x96xf32> to vector<24x8xf32>
    %12 = vector.extract_strided_slice %7 {offsets = [0, 64], sizes = [24, 8], strides = [1, 1]} : vector<24x96xf32> to vector<24x8xf32>
    %cst_12 = arith.constant dense<0.000000e+00> : vector<24x24xf32>
    %13 = tpu.matmul %10, %11, %cst_12 {dimension_numbers = #tpu.dot_dimension_numbers<[1], [1], [0], [0], [0, 0, 1, 0], [], []>} : vector<24x8xf32>, vector<24x8xf32>, vector<24x24xf32> -> vector<24x24xf32>
    %cst_13 = arith.constant 0.353553385 : f32
    %14 = vector.broadcast %cst_13 : f32 to vector<24x24xf32>
    %15 = arith.mulf %13, %14 : vector<24x24xf32>
    %16 = arith.addf %15, %1 : vector<24x24xf32>
    %cst_14 = arith.constant dense<0xFF800000> : vector<24xf32>
    %17 = vector.multi_reduction <maximumf>, %16, %cst_14 [1] : vector<24x24xf32> to vector<24xf32>
    %18 = vector.shape_cast %17 : vector<24xf32> to vector<24x1xf32>
    %19 = vector.broadcast %18 : vector<24x1xf32> to vector<24x24xf32>
    %20 = arith.subf %16, %19 : vector<24x24xf32>
    %21 = math.exp %20 : vector<24x24xf32>
    %cst_15 = arith.constant dense<0.000000e+00> : vector<24xf32>
    %22 = vector.multi_reduction <add>, %21, %cst_15 [1] : vector<24x24xf32> to vector<24xf32>
    %23 = vector.shape_cast %22 : vector<24xf32> to vector<24x1xf32>
    %24 = tpu.reciprocal %23 {approx = true} : vector<24x1xf32> -> vector<24x1xf32>
    %cst_16 = arith.constant dense<0.000000e+00> : vector<24x8xf32>
    %25 = tpu.matmul %21, %12, %cst_16 {dimension_numbers = #tpu.dot_dimension_numbers<[1], [0], [0], [1], [0, 0, 1, 1], [], []>} : vector<24x24xf32>, vector<24x8xf32>, vector<24x8xf32> -> vector<24x8xf32>
    %26 = vector.broadcast %24 : vector<24x1xf32> to vector<24x8xf32>
    %27 = arith.mulf %25, %26 : vector<24x8xf32>
    %28 = vector.extract_strided_slice %8 {offsets = [0, 0], sizes = [8, 32], strides = [1, 1]} : vector<32x32xf32> to vector<8x32xf32>
    %cst_17 = arith.constant dense<0.000000e+00> : vector<24x32xf32>
    %29 = tpu.matmul %27, %28, %cst_17 {dimension_numbers = #tpu.dot_dimension_numbers<[1], [0], [0], [1], [0, 0, 1, 1], [], []>} : vector<24x8xf32>, vector<8x32xf32>, vector<24x32xf32> -> vector<24x32xf32>
    %30 = arith.addf %9, %29 : vector<24x32xf32>
    %31 = vector.extract_strided_slice %7 {offsets = [0, 8], sizes = [24, 8], strides = [1, 1]} : vector<24x96xf32> to vector<24x8xf32>
    %32 = vector.extract_strided_slice %7 {offsets = [0, 40], sizes = [24, 8], strides = [1, 1]} : vector<24x96xf32> to vector<24x8xf32>
    %33 = vector.extract_strided_slice %7 {offsets = [0, 72], sizes = [24, 8], strides = [1, 1]} : vector<24x96xf32> to vector<24x8xf32>
    %cst_18 = arith.constant dense<0.000000e+00> : vector<24x24xf32>
    %34 = tpu.matmul %31, %32, %cst_18 {dimension_numbers = #tpu.dot_dimension_numbers<[1], [1], [0], [0], [0, 0, 1, 0], [], []>} : vector<24x8xf32>, vector<24x8xf32>, vector<24x24xf32> -> vector<24x24xf32>
    %cst_19 = arith.constant 0.353553385 : f32
    %35 = vector.broadcast %cst_19 : f32 to vector<24x24xf32>
    %36 = arith.mulf %34, %35 : vector<24x24xf32>
    %37 = arith.addf %36, %1 : vector<24x24xf32>
    %cst_20 = arith.constant dense<0xFF800000> : vector<24xf32>
    %38 = vector.multi_reduction <maximumf>, %37, %cst_20 [1] : vector<24x24xf32> to vector<24xf32>
    %39 = vector.shape_cast %38 : vector<24xf32> to vector<24x1xf32>
    %40 = vector.broadcast %39 : vector<24x1xf32> to vector<24x24xf32>
    %41 = arith.subf %37, %40 : vector<24x24xf32>
    %42 = math.exp %41 : vector<24x24xf32>
    %cst_21 = arith.constant dense<0.000000e+00> : vector<24xf32>
    %43 = vector.multi_reduction <add>, %42, %cst_21 [1] : vector<24x24xf32> to vector<24xf32>
    %44 = vector.shape_cast %43 : vector<24xf32> to vector<24x1xf32>
    %45 = tpu.reciprocal %44 {approx = true} : vector<24x1xf32> -> vector<24x1xf32>
    %cst_22 = arith.constant dense<0.000000e+00> : vector<24x8xf32>
    %46 = tpu.matmul %42, %33, %cst_22 {dimension_numbers = #tpu.dot_dimension_numbers<[1], [0], [0], [1], [0, 0, 1, 1], [], []>} : vector<24x24xf32>, vector<24x8xf32>, vector<24x8xf32> -> vector<24x8xf32>
    %47 = vector.broadcast %45 : vector<24x1xf32> to vector<24x8xf32>
    %48 = arith.mulf %46, %47 : vector<24x8xf32>
    %49 = vector.extract_strided_slice %8 {offsets = [8, 0], sizes = [8, 32], strides = [1, 1]} : vector<32x32xf32> to vector<8x32xf32>
    %cst_23 = arith.constant dense<0.000000e+00> : vector<24x32xf32>
    %50 = tpu.matmul %48, %49, %cst_23 {dimension_numbers = #tpu.dot_dimension_numbers<[1], [0], [0], [1], [0, 0, 1, 1], [], []>} : vector<24x8xf32>, vector<8x32xf32>, vector<24x32xf32> -> vector<24x32xf32>
    %51 = arith.addf %30, %50 : vector<24x32xf32>
    %52 = vector.extract_strided_slice %7 {offsets = [0, 16], sizes = [24, 8], strides = [1, 1]} : vector<24x96xf32> to vector<24x8xf32>
    %53 = vector.extract_strided_slice %7 {offsets = [0, 48], sizes = [24, 8], strides = [1, 1]} : vector<24x96xf32> to vector<24x8xf32>
    %54 = vector.extract_strided_slice %7 {offsets = [0, 80], sizes = [24, 8], strides = [1, 1]} : vector<24x96xf32> to vector<24x8xf32>
    %cst_24 = arith.constant dense<0.000000e+00> : vector<24x24xf32>
    %55 = tpu.matmul %52, %53, %cst_24 {dimension_numbers = #tpu.dot_dimension_numbers<[1], [1], [0], [0], [0, 0, 1, 0], [], []>} : vector<24x8xf32>, vector<24x8xf32>, vector<24x24xf32> -> vector<24x24xf32>
    %cst_25 = arith.constant 0.353553385 : f32
    %56 = vector.broadcast %cst_25 : f32 to vector<24x24xf32>
    %57 = arith.mulf %55, %56 : vector<24x24xf32>
    %58 = arith.addf %57, %1 : vector<24x24xf32>
    %cst_26 = arith.constant dense<0xFF800000> : vector<24xf32>
    %59 = vector.multi_reduction <maximumf>, %58, %cst_26 [1] : vector<24x24xf32> to vector<24xf32>
    %60 = vector.shape_cast %59 : vector<24xf32> to vector<24x1xf32>
    %61 = vector.broadcast %60 : vector<24x1xf32> to vector<24x24xf32>
    %62 = arith.subf %58, %61 : vector<24x24xf32>
    %63 = math.exp %62 : vector<24x24xf32>
    %cst_27 = arith.constant dense<0.000000e+00> : vector<24xf32>
    %64 = vector.multi_reduction <add>, %63, %cst_27 [1] : vector<24x24xf32> to vector<24xf32>
    %65 = vector.shape_cast %64 : vector<24xf32> to vector<24x1xf32>
    %66 = tpu.reciprocal %65 {approx = true} : vector<24x1xf32> -> vector<24x1xf32>
    %cst_28 = arith.constant dense<0.000000e+00> : vector<24x8xf32>
    %67 = tpu.matmul %63, %54, %cst_28 {dimension_numbers = #tpu.dot_dimension_numbers<[1], [0], [0], [1], [0, 0, 1, 1], [], []>} : vector<24x24xf32>, vector<24x8xf32>, vector<24x8xf32> -> vector<24x8xf32>
    %68 = vector.broadcast %66 : vector<24x1xf32> to vector<24x8xf32>
    %69 = arith.mulf %67, %68 : vector<24x8xf32>
    %70 = vector.extract_strided_slice %8 {offsets = [16, 0], sizes = [8, 32], strides = [1, 1]} : vector<32x32xf32> to vector<8x32xf32>
    %cst_29 = arith.constant dense<0.000000e+00> : vector<24x32xf32>
    %71 = tpu.matmul %69, %70, %cst_29 {dimension_numbers = #tpu.dot_dimension_numbers<[1], [0], [0], [1], [0, 0, 1, 1], [], []>} : vector<24x8xf32>, vector<8x32xf32>, vector<24x32xf32> -> vector<24x32xf32>
    %72 = arith.addf %51, %71 : vector<24x32xf32>
    %73 = vector.extract_strided_slice %7 {offsets = [0, 24], sizes = [24, 8], strides = [1, 1]} : vector<24x96xf32> to vector<24x8xf32>
    %74 = vector.extract_strided_slice %7 {offsets = [0, 56], sizes = [24, 8], strides = [1, 1]} : vector<24x96xf32> to vector<24x8xf32>
    %75 = vector.extract_strided_slice %7 {offsets = [0, 88], sizes = [24, 8], strides = [1, 1]} : vector<24x96xf32> to vector<24x8xf32>
    %cst_30 = arith.constant dense<0.000000e+00> : vector<24x24xf32>
    %76 = tpu.matmul %73, %74, %cst_30 {dimension_numbers = #tpu.dot_dimension_numbers<[1], [1], [0], [0], [0, 0, 1, 0], [], []>} : vector<24x8xf32>, vector<24x8xf32>, vector<24x24xf32> -> vector<24x24xf32>
    %cst_31 = arith.constant 0.353553385 : f32
    %77 = vector.broadcast %cst_31 : f32 to vector<24x24xf32>
    %78 = arith.mulf %76, %77 : vector<24x24xf32>
    %79 = arith.addf %78, %1 : vector<24x24xf32>
    %cst_32 = arith.constant dense<0xFF800000> : vector<24xf32>
    %80 = vector.multi_reduction <maximumf>, %79, %cst_32 [1] : vector<24x24xf32> to vector<24xf32>
    %81 = vector.shape_cast %80 : vector<24xf32> to vector<24x1xf32>
    %82 = vector.broadcast %81 : vector<24x1xf32> to vector<24x24xf32>
    %83 = arith.subf %79, %82 : vector<24x24xf32>
    %84 = math.exp %83 : vector<24x24xf32>
    %cst_33 = arith.constant dense<0.000000e+00> : vector<24xf32>
    %85 = vector.multi_reduction <add>, %84, %cst_33 [1] : vector<24x24xf32> to vector<24xf32>
    %86 = vector.shape_cast %85 : vector<24xf32> to vector<24x1xf32>
    %87 = tpu.reciprocal %86 {approx = true} : vector<24x1xf32> -> vector<24x1xf32>
    %cst_34 = arith.constant dense<0.000000e+00> : vector<24x8xf32>
    %88 = tpu.matmul %84, %75, %cst_34 {dimension_numbers = #tpu.dot_dimension_numbers<[1], [0], [0], [1], [0, 0, 1, 1], [], []>} : vector<24x24xf32>, vector<24x8xf32>, vector<24x8xf32> -> vector<24x8xf32>
    %89 = vector.broadcast %87 : vector<24x1xf32> to vector<24x8xf32>
    %90 = arith.mulf %88, %89 : vector<24x8xf32>
    %91 = vector.extract_strided_slice %8 {offsets = [24, 0], sizes = [8, 32], strides = [1, 1]} : vector<32x32xf32> to vector<8x32xf32>
    %cst_35 = arith.constant dense<0.000000e+00> : vector<24x32xf32>
    %92 = tpu.matmul %90, %91, %cst_35 {dimension_numbers = #tpu.dot_dimension_numbers<[1], [0], [0], [1], [0, 0, 1, 1], [], []>} : vector<24x8xf32>, vector<8x32xf32>, vector<24x32xf32> -> vector<24x32xf32>
    %93 = arith.addf %72, %92 : vector<24x32xf32>
    %c0_36 = arith.constant 0 : index
    %c0_37 = arith.constant 0 : index
    %94 = vector.load %arg7[%c0_36, %c0_37] : memref<1x32xf32, #tpu.memory_space<vmem>>, vector<1x32xf32>
    %95 = vector.broadcast %94 : vector<1x32xf32> to vector<24x32xf32>
    %96 = arith.addf %93, %95 : vector<24x32xf32>
    %97 = vector.broadcast %2 : vector<24x1xf32> to vector<24x32xf32>
    %98 = arith.mulf %96, %97 : vector<24x32xf32>
    %99 = arith.addf %0, %98 : vector<24x32xf32>
    %cst_38 = arith.constant dense<0.000000e+00> : vector<24xf32>
    %100 = vector.multi_reduction <add>, %99, %cst_38 [1] : vector<24x32xf32> to vector<24xf32>
    %101 = vector.shape_cast %100 : vector<24xf32> to vector<24x1xf32>
    %cst_39 = arith.constant 3.200000e+01 : f32
    %102 = vector.broadcast %cst_39 : f32 to vector<24x1xf32>
    %103 = arith.divf %101, %102 : vector<24x1xf32>
    %104 = vector.broadcast %103 : vector<24x1xf32> to vector<24x32xf32>
    %105 = arith.subf %99, %104 : vector<24x32xf32>
    %106 = arith.mulf %105, %105 : vector<24x32xf32>
    %cst_40 = arith.constant dense<0.000000e+00> : vector<24xf32>
    %107 = vector.multi_reduction <add>, %106, %cst_40 [1] : vector<24x32xf32> to vector<24xf32>
    %108 = vector.shape_cast %107 : vector<24xf32> to vector<24x1xf32>
    %cst_41 = arith.constant 3.200000e+01 : f32
    %109 = vector.broadcast %cst_41 : f32 to vector<24x1xf32>
    %110 = arith.divf %108, %109 : vector<24x1xf32>
    %cst_42 = arith.constant 9.99999974E-6 : f32
    %111 = vector.broadcast %cst_42 : f32 to vector<24x1xf32>
    %112 = arith.addf %110, %111 : vector<24x1xf32>
    %113 = math.rsqrt %112 : vector<24x1xf32>
    %114 = vector.broadcast %113 : vector<24x1xf32> to vector<24x32xf32>
    %115 = arith.mulf %105, %114 : vector<24x32xf32>
    %c0_43 = arith.constant 0 : index
    %c0_44 = arith.constant 0 : index
    %116 = vector.load %arg8[%c0_43, %c0_44] : memref<1x32xf32, #tpu.memory_space<vmem>>, vector<1x32xf32>
    %117 = vector.broadcast %116 : vector<1x32xf32> to vector<24x32xf32>
    %118 = arith.mulf %115, %117 : vector<24x32xf32>
    %c0_45 = arith.constant 0 : index
    %c0_46 = arith.constant 0 : index
    %119 = vector.load %arg9[%c0_45, %c0_46] : memref<1x32xf32, #tpu.memory_space<vmem>>, vector<1x32xf32>
    %120 = vector.broadcast %119 : vector<1x32xf32> to vector<24x32xf32>
    %121 = arith.addf %118, %120 : vector<24x32xf32>
    %c0_47 = arith.constant 0 : index
    %c0_48 = arith.constant 0 : index
    %122 = vector.load %arg10[%c0_47, %c0_48] : memref<32x64xf32, #tpu.memory_space<vmem>>, vector<32x64xf32>
    %cst_49 = arith.constant dense<0.000000e+00> : vector<24x64xf32>
    %123 = tpu.matmul %121, %122, %cst_49 {dimension_numbers = #tpu.dot_dimension_numbers<[1], [0], [0], [1], [0, 0, 1, 1], [], []>} : vector<24x32xf32>, vector<32x64xf32>, vector<24x64xf32> -> vector<24x64xf32>
    %c0_50 = arith.constant 0 : index
    %c0_51 = arith.constant 0 : index
    %124 = vector.load %arg11[%c0_50, %c0_51] : memref<1x64xf32, #tpu.memory_space<vmem>>, vector<1x64xf32>
    %125 = vector.broadcast %124 : vector<1x64xf32> to vector<24x64xf32>
    %126 = arith.addf %123, %125 : vector<24x64xf32>
    %cst_52 = arith.constant 0.000000e+00 : f32
    %127 = vector.broadcast %cst_52 : f32 to vector<24x64xf32>
    %128 = arith.maximumf %126, %127 : vector<24x64xf32>
    %c0_53 = arith.constant 0 : index
    %c0_54 = arith.constant 0 : index
    %129 = vector.load %arg12[%c0_53, %c0_54] : memref<64x32xf32, #tpu.memory_space<vmem>>, vector<64x32xf32>
    %cst_55 = arith.constant dense<0.000000e+00> : vector<24x32xf32>
    %130 = tpu.matmul %128, %129, %cst_55 {dimension_numbers = #tpu.dot_dimension_numbers<[1], [0], [0], [1], [0, 0, 1, 1], [], []>} : vector<24x64xf32>, vector<64x32xf32>, vector<24x32xf32> -> vector<24x32xf32>
    %c0_56 = arith.constant 0 : index
    %c0_57 = arith.constant 0 : index
    %131 = vector.load %arg13[%c0_56, %c0_57] : memref<1x32xf32, #tpu.memory_space<vmem>>, vector<1x32xf32>
    %132 = vector.broadcast %131 : vector<1x32xf32> to vector<24x32xf32>
    %133 = arith.addf %130, %132 : vector<24x32xf32>
    %134 = arith.addf %121, %133 : vector<24x32xf32>
    %cst_58 = arith.constant dense<0.000000e+00> : vector<24xf32>
    %135 = vector.multi_reduction <add>, %134, %cst_58 [1] : vector<24x32xf32> to vector<24xf32>
    %136 = vector.shape_cast %135 : vector<24xf32> to vector<24x1xf32>
    %cst_59 = arith.constant 3.200000e+01 : f32
    %137 = vector.broadcast %cst_59 : f32 to vector<24x1xf32>
    %138 = arith.divf %136, %137 : vector<24x1xf32>
    %139 = vector.broadcast %138 : vector<24x1xf32> to vector<24x32xf32>
    %140 = arith.subf %134, %139 : vector<24x32xf32>
    %141 = arith.mulf %140, %140 : vector<24x32xf32>
    %cst_60 = arith.constant dense<0.000000e+00> : vector<24xf32>
    %142 = vector.multi_reduction <add>, %141, %cst_60 [1] : vector<24x32xf32> to vector<24xf32>
    %143 = vector.shape_cast %142 : vector<24xf32> to vector<24x1xf32>
    %cst_61 = arith.constant 3.200000e+01 : f32
    %144 = vector.broadcast %cst_61 : f32 to vector<24x1xf32>
    %145 = arith.divf %143, %144 : vector<24x1xf32>
    %cst_62 = arith.constant 9.99999974E-6 : f32
    %146 = vector.broadcast %cst_62 : f32 to vector<24x1xf32>
    %147 = arith.addf %145, %146 : vector<24x1xf32>
    %148 = math.rsqrt %147 : vector<24x1xf32>
    %149 = vector.broadcast %148 : vector<24x1xf32> to vector<24x32xf32>
    %150 = arith.mulf %140, %149 : vector<24x32xf32>
    %c0_63 = arith.constant 0 : index
    %c0_64 = arith.constant 0 : index
    %151 = vector.load %arg14[%c0_63, %c0_64] : memref<1x32xf32, #tpu.memory_space<vmem>>, vector<1x32xf32>
    %152 = vector.broadcast %151 : vector<1x32xf32> to vector<24x32xf32>
    %153 = arith.mulf %150, %152 : vector<24x32xf32>
    %c0_65 = arith.constant 0 : index
    %c0_66 = arith.constant 0 : index
    %154 = vector.load %arg15[%c0_65, %c0_66] : memref<1x32xf32, #tpu.memory_space<vmem>>, vector<1x32xf32>
    %155 = vector.broadcast %154 : vector<1x32xf32> to vector<24x32xf32>
    %156 = arith.addf %153, %155 : vector<24x32xf32>
    %c0_67 = arith.constant 0 : index
    %c0_68 = arith.constant 0 : index
    %157 = vector.load %arg16[%c0_67, %c0_68] : memref<24x32xf32, #tpu.memory_space<vmem>>, vector<24x32xf32>
    tpu.vector_store %arg16[%c0_67, %c0_68], %156 {strides = array<i32>} : memref<24x32xf32, #tpu.memory_space<vmem>>, vector<24x32xf32>,
    return
  }
  func.func @transform_0(%arg0: i32) -> (i32, i32) {
    %c0_i32 = arith.constant 0 : i32
    %c0_i32_0 = arith.constant 0 : i32
    %c0_i32_1 = arith.constant 0 : i32
    return %c0_i32, %c0_i32_0 : i32, i32
  }
  func.func @transform_1(%arg0: i32) -> (i32, i32) {
    %c0_i32 = arith.constant 0 : i32
    %c0_i32_0 = arith.constant 0 : i32
    %c0_i32_1 = arith.constant 0 : i32
    return %c0_i32, %c0_i32_0 : i32, i32
  }
  func.func @transform_2(%arg0: i32) -> (i32, i32) {
    %c0_i32 = arith.constant 0 : i32
    %c0_i32_0 = arith.constant 0 : i32
    %c0_i32_1 = arith.constant 0 : i32
    return %c0_i32, %c0_i32_0 : i32, i32
  }
  func.func @transform_3(%arg0: i32) -> (i32, i32) {
    %c0_i32 = arith.constant 0 : i32
    %c0_i32_0 = arith.constant 0 : i32
    %c0_i32_1 = arith.constant 0 : i32
    return %c0_i32, %c0_i32_0 : i32, i32
  }
  func.func @transform_4(%arg0: i32) -> (i32, i32) {
    %c0_i32 = arith.constant 0 : i32
    %c0_i32_0 = arith.constant 0 : i32
    %c0_i32_1 = arith.constant 0 : i32
    return %c0_i32, %c0_i32_0 : i32, i32
  }
  func.func @transform_5(%arg0: i32) -> (i32, i32) {
    %c0_i32 = arith.constant 0 : i32
    %c0_i32_0 = arith.constant 0 : i32
    %c0_i32_1 = arith.constant 0 : i32
    return %c0_i32, %c0_i32_0 : i32, i32
  }
  func.func @transform_6(%arg0: i32) -> (i32, i32) {
    %c0_i32 = arith.constant 0 : i32
    %c0_i32_0 = arith.constant 0 : i32
    %c0_i32_1 = arith.constant 0 : i32
    return %c0_i32, %c0_i32_0 : i32, i32
  }
  func.func @transform_7(%arg0: i32) -> (i32, i32) {
    %c0_i32 = arith.constant 0 : i32
    %c0_i32_0 = arith.constant 0 : i32
    %c0_i32_1 = arith.constant 0 : i32
    return %c0_i32, %c0_i32_0 : i32, i32
  }
  func.func @transform_8(%arg0: i32) -> (i32, i32) {
    %c0_i32 = arith.constant 0 : i32
    %c0_i32_0 = arith.constant 0 : i32
    %c0_i32_1 = arith.constant 0 : i32
    return %c0_i32, %c0_i32_0 : i32, i32
  }
  func.func @transform_9(%arg0: i32) -> (i32, i32) {
    %c0_i32 = arith.constant 0 : i32
    %c0_i32_0 = arith.constant 0 : i32
    %c0_i32_1 = arith.constant 0 : i32
    return %c0_i32, %c0_i32_0 : i32, i32
  }
  func.func @transform_10(%arg0: i32) -> (i32, i32) {
    %c0_i32 = arith.constant 0 : i32
    %c0_i32_0 = arith.constant 0 : i32
    %c0_i32_1 = arith.constant 0 : i32
    return %c0_i32, %c0_i32_0 : i32, i32
  }
  func.func @transform_11(%arg0: i32) -> (i32, i32) {
    %c0_i32 = arith.constant 0 : i32
    %c0_i32_0 = arith.constant 0 : i32
    %c0_i32_1 = arith.constant 0 : i32
    return %c0_i32, %c0_i32_0 : i32, i32
  }
  func.func @transform_12(%arg0: i32) -> (i32, i32) {
    %c0_i32 = arith.constant 0 : i32
    %c0_i32_0 = arith.constant 0 : i32
    %c0_i32_1 = arith.constant 0 : i32
    return %c0_i32, %c0_i32_0 : i32, i32
  }
  func.func @transform_13(%arg0: i32) -> (i32, i32) {
    %c0_i32 = arith.constant 0 : i32
    %c0_i32_0 = arith.constant 0 : i32
    %c0_i32_1 = arith.constant 0 : i32
    return %c0_i32, %c0_i32_0 : i32, i32
  }
  func.func @transform_14(%arg0: i32) -> (i32, i32) {
    %c0_i32 = arith.constant 0 : i32
    %c0_i32_0 = arith.constant 0 : i32
    %c0_i32_1 = arith.constant 0 : i32
    return %c0_i32, %c0_i32_0 : i32, i32
  }
  func.func @transform_15(%arg0: i32) -> (i32, i32) {
    %c0_i32 = arith.constant 0 : i32
    %c0_i32_0 = arith.constant 0 : i32
    %c0_i32_1 = arith.constant 0 : i32
    return %c0_i32, %c0_i32_0 : i32, i32
  }
}

</mosaic_0001>

<llo_original>
// kernel: eq.8
$region0: #{eq.8}
  %s0 = inlined_call_operand.vmem [shape: s32[3,8], index: 0, kind: input, shape index: {}]
  %s1 = inlined_call_operand.vmem [shape: s32[24], index: 1, kind: output, shape index: {}]
  $region1: #{eq.8} parent=0
    #allocation0 [shape = 'u8[4096]{0}', space=vmem, size = 0x1000, scoped, tag = 'scoped mem for output reshape']
    #allocation1 [shape = 'u8[4096]{0}', space=vmem, size = 0x1000, scoped, tag = 'scoped mem for input reshape']
    %s3 = sshll.u32 1, 4
    %s4 = ssub.s32 %s3, 1
    %v5 = vld [vmem:[%s0] sm:%s4]
    %6 = vst [vmem:[#allocation1] sm:%s4] %v5
    %v7 = vld [vmem:[#allocation1] sm:$0x1]
    %vm8 = vcmask 64512
    %9 = vst.msk [vmem:[#allocation0] sm:$0x1] %vm8, %v7
    %s10 = scalar_lea.vmem [#allocation1], 2
    %v11 = vld [vmem:[%s10] sm:$0x1]
    %12 = vrot.lane.b32.xlu0 %v11, 16
    %v13 = vpop.permute.xlu0 %12
    %vm14 = vcmask 195712
    %15 = vst.msk [vmem:[#allocation0] sm:$0x1] %vm14, %v13
    %s16 = scalar_lea.vmem [#allocation1], 1
    %v17 = vld [vmem:[%s16] sm:$0x1]
    %18 = vrot.lane.b32.xlu0 %v17, 8
    %v19 = vpop.permute.xlu0 %18
    %vm20 = vcmask 130112
    %21 = vst.msk [vmem:[#allocation0] sm:$0x1] %vm20, %v19
    %s23 = sshll.u32 1, 1
    %s24 = ssub.s32 %s23, 1
    %v26 = vld [vmem:[#allocation0] sm:%s24]
    %s27 = sshll.u32 1, 1
    %s28 = ssub.s32 %s27, 1
    %29 = vst [vmem:[%s1] sm:%s28] %v26

// kernel: hand_transformer_pallas.1
$region0: #{hand_transformer_pallas.1}
  #allocation0 [shape = 'u32[]', space=smem, size = 0x4, offset = 0x4, fixed_abs, tag = 'smem constant byte address 0x4 - core index']
  #allocation1 [shape = 'u32[144,128]{1,0:T(1,128)}', space=vmem, size = 0x12000, scoped, tag = 'internal scratch']
  %s0 = inlined_call_operand.vmem [shape: f32[24,32], index: 0, kind: input, shape index: {}]
  %s1 = inlined_call_operand.vmem [shape: f32[24,24], index: 1, kind: input, shape index: {}]
  %s2 = inlined_call_operand.vmem [shape: f32[24,1], index: 2, kind: input, shape index: {}]
  %s3 = inlined_call_operand.vmem [shape: f32[32,96], index: 3, kind: input, shape index: {}]
  %s4 = inlined_call_operand.vmem [shape: f32[1,96], index: 4, kind: input, shape index: {}]
  %s5 = inlined_call_operand.vmem [shape: f32[32,32], index: 5, kind: input, shape index: {}]
  %s6 = inlined_call_operand.vmem [shape: f32[1,32], index: 6, kind: input, shape index: {}]
  %s7 = inlined_call_operand.vmem [shape: f32[1,32], index: 7, kind: input, shape index: {}]
  %s8 = inlined_call_operand.vmem [shape: f32[1,32], index: 8, kind: input, shape index: {}]
  %s9 = inlined_call_operand.vmem [shape: f32[32,64], index: 9, kind: input, shape index: {}]
  %s10 = inlined_call_operand.vmem [shape: f32[1,64], index: 10, kind: input, shape index: {}]
  %s11 = inlined_call_operand.vmem [shape: f32[64,32], index: 11, kind: input, shape index: {}]
  %s12 = inlined_call_operand.vmem [shape: f32[1,32], index: 12, kind: input, shape index: {}]
  %s13 = inlined_call_operand.vmem [shape: f32[1,32], index: 13, kind: input, shape index: {}]
  %s14 = inlined_call_operand.vmem [shape: f32[1,32], index: 14, kind: input, shape index: {}]
  %s15 = inlined_call_operand.hbm [shape: f32[24,32], index: 15, kind: output, shape index: {}]
  %s16 = sld [smem:[#allocation0]]
  $region70: #{hand_transformer_pallas.1} parent=0
    _
  %s18 = ssub.s32 1, %s16
  %s19 = scalar_select 0, %s18, %s16
  $region1: #{hand_transformer_pallas.1} parent=0
    #allocation2 [shape = 'u8[12288]{0}', space=vmem, size = 0x3000, scoped, tag = 'output window, operand 0, single buffered']
    #allocation3 [shape = 's32[1]{0}', space=sflag, size = 0x4, scoped, tag = 'scoped memory for hand_transformer_pallas.1']
    %20 = vsyncpa [#allocation3], 0
    // Predicated region
    $region2: #{hand_transformer_pallas.1} parent=1 // pred_check
      _
    $region3: #{hand_transformer_pallas.1} parent=1 // pred_check_branch
      %22 = sbr.rel (0) target = $region5
    $region4: #{hand_transformer_pallas.1} parent=1 // pred_region
      _
    $region5: #{hand_transformer_pallas.1} parent=1 // pred_fallthru
      _
    // Predicated region
    $region6: #{hand_transformer_pallas.1} parent=1 // pred_check
      _
    $region7: #{hand_transformer_pallas.1} parent=1 // pred_check_branch
      %24 = sbr.rel (0) target = $region9
    $region8: #{hand_transformer_pallas.1} parent=1 // pred_region
      _
    $region9: #{hand_transformer_pallas.1} parent=1 // pred_fallthru
      _
    // Predicated region
    $region10: #{hand_transformer_pallas.1} parent=1 // pred_check
      _
    $region11: #{hand_transformer_pallas.1} parent=1 // pred_check_branch
      %26 = sbr.rel (0) target = $region13
    $region12: #{hand_transformer_pallas.1} parent=1 // pred_region
      _
    $region13: #{hand_transformer_pallas.1} parent=1 // pred_fallthru
      _
    // Predicated region
    $region14: #{hand_transformer_pallas.1} parent=1 // pred_check
      _
    $region15: #{hand_transformer_pallas.1} parent=1 // pred_check_branch
      %28 = sbr.rel (0) target = $region17
    $region16: #{hand_transformer_pallas.1} parent=1 // pred_region
      _
    $region17: #{hand_transformer_pallas.1} parent=1 // pred_fallthru
      _
    // Predicated region
    $region18: #{hand_transformer_pallas.1} parent=1 // pred_check
      _
    $region19: #{hand_transformer_pallas.1} parent=1 // pred_check_branch
      %30 = sbr.rel (0) target = $region21
    $region20: #{hand_transformer_pallas.1} parent=1 // pred_region
      _
    $region21: #{hand_transformer_pallas.1} parent=1 // pred_fallthru
      _
    // Predicated region
    $region22: #{hand_transformer_pallas.1} parent=1 // pred_check
      _
    $region23: #{hand_transformer_pallas.1} parent=1 // pred_check_branch
      %32 = sbr.rel (0) target = $region25
    $region24: #{hand_transformer_pallas.1} parent=1 // pred_region
      _
    $region25: #{hand_transformer_pallas.1} parent=1 // pred_fallthru
      _
    // Predicated region
    $region26: #{hand_transformer_pallas.1} parent=1 // pred_check
      _
    $region27: #{hand_transformer_pallas.1} parent=1 // pred_check_branch
      %34 = sbr.rel (0) target = $region29
    $region28: #{hand_transformer_pallas.1} parent=1 // pred_region
      _
    $region29: #{hand_transformer_pallas.1} parent=1 // pred_fallthru
      _
    // Predicated region
    $region30: #{hand_transformer_pallas.1} parent=1 // pred_check
      _
    $region31: #{hand_transformer_pallas.1} parent=1 // pred_check_branch
      %36 = sbr.rel (0) target = $region33
    $region32: #{hand_transformer_pallas.1} parent=1 // pred_region
      _
    $region33: #{hand_transformer_pallas.1} parent=1 // pred_fallthru
      _
    // Predicated region
    $region34: #{hand_transformer_pallas.1} parent=1 // pred_check
      _
    $region35: #{hand_transformer_pallas.1} parent=1 // pred_check_branch
      %38 = sbr.rel (0) target = $region37
    $region36: #{hand_transformer_pallas.1} parent=1 // pred_region
      _
    $region37: #{hand_transformer_pallas.1} parent=1 // pred_fallthru
      _
    // Predicated region
    $region38: #{hand_transformer_pallas.1} parent=1 // pred_check
      _
    $region39: #{hand_transformer_pallas.1} parent=1 // pred_check_branch
      %40 = sbr.rel (0) target = $region41
    $region40: #{hand_transformer_pallas.1} parent=1 // pred_region
      _
    $region41: #{hand_transformer_pallas.1} parent=1 // pred_fallthru
      _
    // Predicated region
    $region42: #{hand_transformer_pallas.1} parent=1 // pred_check
      _
    $region43: #{hand_transformer_pallas.1} parent=1 // pred_check_branch
      %42 = sbr.rel (0) target = $region45
    $region44: #{hand_transformer_pallas.1} parent=1 // pred_region
      _
    $region45: #{hand_transformer_pallas.1} parent=1 // pred_fallthru
      _
    // Predicated region
    $region46: #{hand_transformer_pallas.1} parent=1 // pred_check
      _
    $region47: #{hand_transformer_pallas.1} parent=1 // pred_check_branch
      %44 = sbr.rel (0) target = $region49
    $region48: #{hand_transformer_pallas.1} parent=1 // pred_region
      _
    $region49: #{hand_transformer_pallas.1} parent=1 // pred_fallthru
      _
    // Predicated region
    $region50: #{hand_transformer_pallas.1} parent=1 // pred_check
      _
    $region51: #{hand_transformer_pallas.1} parent=1 // pred_check_branch
      %46 = sbr.rel (0) target = $region53
    $region52: #{hand_transformer_pallas.1} parent=1 // pred_region
      _
    $region53: #{hand_transformer_pallas.1} parent=1 // pred_fallthru
      _
    // Predicated region
    $region54: #{hand_transformer_pallas.1} parent=1 // pred_check
      _
    $region55: #{hand_transformer_pallas.1} parent=1 // pred_check_branch
      %48 = sbr.rel (0) target = $region57
    $region56: #{hand_transformer_pallas.1} parent=1 // pred_region
      _
    $region57: #{hand_transformer_pallas.1} parent=1 // pred_fallthru
      _
    // Predicated region
    $region58: #{hand_transformer_pallas.1} parent=1 // pred_check
      _
    $region59: #{hand_transformer_pallas.1} parent=1 // pred_check_branch
      %50 = sbr.rel (0) target = $region61
    $region60: #{hand_transformer_pallas.1} parent=1 // pred_region
      _
    $region61: #{hand_transformer_pallas.1} parent=1 // pred_fallthru
      _
    %v51 = vld [vmem:[%s0] sm:$0xff]
    %v52 = vld [vmem:[%s0 + $0x8] sm:$0xff]
    %v53 = vld [vmem:[%s0 + $0x10] sm:$0xff]
    %v54 = vld [vmem:[%s1] sm:$0xff]
    %v55 = vld [vmem:[%s1 + $0x8] sm:$0xff]
    %v56 = vld [vmem:[%s1 + $0x10] sm:$0xff]
    %v57 = vld [vmem:[%s2] sm:$0xff]
    %v58 = vld [vmem:[%s2 + $0x8] sm:$0xff]
    %v59 = vld [vmem:[%s2 + $0x10] sm:$0xff]
    %v60 = vld [vmem:[%s3] sm:$0xff]
    %v61 = vld [vmem:[%s3 + $0x8] sm:$0xff]
    %v62 = vld [vmem:[%s3 + $0x10] sm:$0xff]
    %v63 = vld [vmem:[%s3 + $0x18] sm:$0xff]
    %v64 = vld [vmem:[%s4] sm:$0x1]
    %v66 = vlaneseq
    %v67 = vshrl.u32 %v66, 7
    %v68 = vsub.s32 0, %v67
    %v69 = vrot.slane %v64, %v68
    %vm71 = vcmask 261120
    %v73 = vsel %vm71, %v51, 0
    %v76 = vsel %vm71, %v52, 0
    %v79 = vsel %vm71, %v53, 0
    %81 = vmatprep.subr.mxu0 0.0
    %82 = vmatpush1.msra.mxu0 0.0
    %83 = vmatprep.subr.mxu0 0.0
    %84 = vmatpush1.msra.mxu0 0.0
    %85 = vmatprep.subr.mxu0 0.0
    %86 = vmatpush1.msra.mxu0 0.0
    %87 = vmatprep.subr.mxu0 0.0
    %88 = vmatpush1.msra.mxu0 0.0
    %89 = vmatprep.subr.mxu0 0.0
    %90 = vmatpush1.msra.mxu0 0.0
    %91 = vmatprep.subr.mxu0 0.0
    %92 = vmatpush1.msra.mxu0 0.0
    %93 = vmatprep.subr.mxu0 0.0
    %94 = vmatpush1.msra.mxu0 0.0
    %95 = vmatprep.subr.mxu0 0.0
    %96 = vmatpush1.msra.mxu0 0.0
    %97 = vmatprep.subr.mxu0 0.0
    %98 = vmatpush1.msra.mxu0 0.0
    %99 = vmatprep.subr.mxu0 0.0
    %100 = vmatpush1.msra.mxu0 0.0
    %101 = vmatprep.subr.mxu0 0.0
    %102 = vmatpush1.msra.mxu0 0.0
    %103 = vmatprep.subr.mxu0 0.0
    %104 = vmatpush1.msra.mxu0 0.0
    %105 = vmatprep.subr.mxu0 0.0
    %106 = vmatpush1.msra.mxu0 %v63
    %107 = vmatprep.subr.mxu0 0.0
    %108 = vmatpush1.msra.mxu0 %v62
    %109 = vmatprep.subr.mxu0 0.0
    %110 = vmatpush1.msra.mxu0 %v61
    %111 = vmatprep.subr.mxu0 0.0
    %112 = vmatpush1.msra.mxu0 %v60
    %113 = vmatprep.subr.mxu0 0.0
    %114 = vmatpush2.msra.mxu0 0.0
    %115 = vmatprep.subr.mxu0 0.0
    %116 = vmatpush2.msra.mxu0 0.0
    %117 = vmatprep.subr.mxu0 0.0
    %118 = vmatpush2.msra.mxu0 0.0
    %119 = vmatprep.subr.mxu0 0.0
    %120 = vmatpush2.msra.mxu0 0.0
    %121 = vmatprep.subr.mxu0 0.0
    %122 = vmatpush2.msra.mxu0 0.0
    %123 = vmatprep.subr.mxu0 0.0
    %124 = vmatpush2.msra.mxu0 0.0
    %125 = vmatprep.subr.mxu0 0.0
    %126 = vmatpush2.msra.mxu0 0.0
    %127 = vmatprep.subr.mxu0 0.0
    %128 = vmatpush2.msra.mxu0 0.0
    %129 = vmatprep.subr.mxu0 0.0
    %130 = vmatpush2.msra.mxu0 0.0
    %131 = vmatprep.subr.mxu0 0.0
    %132 = vmatpush2.msra.mxu0 0.0
    %133 = vmatprep.subr.mxu0 0.0
    %134 = vmatpush2.msra.mxu0 0.0
    %135 = vmatprep.subr.mxu0 0.0
    %136 = vmatpush2.msra.mxu0 0.0
    %137 = vmatprep.subr.mxu0 0.0
    %138 = vmatpush2.msra.mxu0 0.0
    %139 = vmatprep.subr.mxu0 0.0
    %140 = vmatpush2.msra.mxu0 0.0
    %141 = vmatprep.subr.mxu0 0.0
    %142 = vmatpush2.msra.mxu0 0.0
    %143 = vmatprep.subr.mxu0 0.0
    %144 = vmatpush2.msra.mxu0 0.0
    %145 = vmatprep.mubr.f32.mxu0 0.0
    %146 = vmatmul.mubr.f32.gmra.mxu0 %v73
    %v147 = vpop.f32.mrf.mxu0
    %v148 = vadd.f32 %v69, %v147
    %v149 = vpop.f32.mrf.mxu0
    %150 = vmatprep.mubr.f32.mxu0 0.0
    %151 = vmatmul.mubr.f32.gmra.mxu0 %v76
    %v152 = vpop.f32.mrf.mxu0
    %v153 = vadd.f32 %v69, %v152
    %v154 = vpop.f32.mrf.mxu0
    %155 = vmatprep.mubr.f32.mxu0 0.0
    %156 = vmatmul.mubr.f32.gmra.mxu0 %v79
    %v157 = vpop.f32.mrf.mxu0
    %v158 = vadd.f32 %v69, %v157
    %v159 = vpop.f32.mrf.mxu0
    %160 = vdwg.mxu0
    %v161 = vld [vmem:[%s5] sm:$0xff]
    %v162 = vld [vmem:[%s5 + $0x8] sm:$0xff]
    %v163 = vld [vmem:[%s5 + $0x10] sm:$0xff]
    %v164 = vld [vmem:[%s5 + $0x18] sm:$0xff]
    %168 = vrot.lane.b32.xlu0 %v148, 96
    %v169 = vpop.permute.xlu0 %168
    %170 = vrot.lane.b32.xlu0 %v153, 96
    %v171 = vpop.permute.xlu0 %170
    %172 = vrot.lane.b32.xlu0 %v158, 96
    %v173 = vpop.permute.xlu0 %172
    %vm174 = vcmask 64512
    %v175 = vsel %vm174, %v148, 0
    %v177 = vsel %vm174, %v153, 0
    %v179 = vsel %vm174, %v158, 0
    %v181 = vsel %vm174, %v169, 0
    %v183 = vsel %vm174, %v171, 0
    %v185 = vsel %vm174, %v173, 0
    %187 = vmatprep.subr.mxu0 0.0
    %188 = vmatpush1.xpose.msra.mxu0 0.0
    %189 = vmatprep.subr.mxu0 0.0
    %190 = vmatpush1.xpose.msra.mxu0 0.0
    %191 = vmatprep.subr.mxu0 0.0
    %192 = vmatpush1.xpose.msra.mxu0 0.0
    %193 = vmatprep.subr.mxu0 0.0
    %194 = vmatpush1.xpose.msra.mxu0 0.0
    %195 = vmatprep.subr.mxu0 0.0
    %196 = vmatpush1.xpose.msra.mxu0 0.0
    %197 = vmatprep.subr.mxu0 0.0
    %198 = vmatpush1.xpose.msra.mxu0 0.0
    %199 = vmatprep.subr.mxu0 0.0
    %200 = vmatpush1.xpose.msra.mxu0 0.0
    %201 = vmatprep.subr.mxu0 0.0
    %202 = vmatpush1.xpose.msra.mxu0 0.0
    %203 = vmatprep.subr.mxu0 0.0
    %204 = vmatpush1.xpose.msra.mxu0 0.0
    %205 = vmatprep.subr.mxu0 0.0
    %206 = vmatpush1.xpose.msra.mxu0 0.0
    %207 = vmatprep.subr.mxu0 0.0
    %208 = vmatpush1.xpose.msra.mxu0 0.0
    %209 = vmatprep.subr.mxu0 0.0
    %210 = vmatpush1.xpose.msra.mxu0 0.0
    %211 = vmatprep.subr.mxu0 0.0
    %212 = vmatpush1.xpose.msra.mxu0 0.0
    %213 = vmatprep.subr.mxu0 0.0
    %214 = vmatpush1.xpose.msra.mxu0 %v185
    %215 = vmatprep.subr.mxu0 0.0
    %216 = vmatpush1.xpose.msra.mxu0 %v183
    %217 = vmatprep.subr.mxu0 0.0
    %218 = vmatpush1.xpose.msra.mxu0 %v181
    %219 = vmatprep.subr.mxu0 0.0
    %220 = vmatpush2.xpose.msra.mxu0 0.0
    %221 = vmatprep.subr.mxu0 0.0
    %222 = vmatpush2.xpose.msra.mxu0 0.0
    %223 = vmatprep.subr.mxu0 0.0
    %224 = vmatpush2.xpose.msra.mxu0 0.0
    %225 = vmatprep.subr.mxu0 0.0
    %226 = vmatpush2.xpose.msra.mxu0 0.0
    %227 = vmatprep.subr.mxu0 0.0
    %228 = vmatpush2.xpose.msra.mxu0 0.0
    %229 = vmatprep.subr.mxu0 0.0
    %230 = vmatpush2.xpose.msra.mxu0 0.0
    %231 = vmatprep.subr.mxu0 0.0
    %232 = vmatpush2.xpose.msra.mxu0 0.0
    %233 = vmatprep.subr.mxu0 0.0
    %234 = vmatpush2.xpose.msra.mxu0 0.0
    %235 = vmatprep.subr.mxu0 0.0
    %236 = vmatpush2.xpose.msra.mxu0 0.0
    %237 = vmatprep.subr.mxu0 0.0
    %238 = vmatpush2.xpose.msra.mxu0 0.0
    %239 = vmatprep.subr.mxu0 0.0
    %240 = vmatpush2.xpose.msra.mxu0 0.0
    %241 = vmatprep.subr.mxu0 0.0
    %242 = vmatpush2.xpose.msra.mxu0 0.0
    %243 = vmatprep.subr.mxu0 0.0
    %244 = vmatpush2.xpose.msra.mxu0 0.0
    %245 = vmatprep.subr.mxu0 0.0
    %246 = vmatpush2.xpose.msra.mxu0 0.0
    %247 = vmatprep.subr.mxu0 0.0
    %248 = vmatpush2.xpose.msra.mxu0 0.0
    %249 = vmatprep.subr.mxu0 0.0
    %250 = vmatpush2.xpose.msra.mxu0 0.0
    %251 = vmatprep.mubr.f32.mxu0 0.0
    %252 = vmatmul.mubr.f32.gmra.mxu0 %v175
    %v253 = vpop.f32.mrf.mxu0
    %v254 = vadd.f32 0.0, %v253
    %v255 = vpop.f32.mrf.mxu0
    %256 = vmatprep.mubr.f32.mxu0 0.0
    %257 = vmatmul.mubr.f32.gmra.mxu0 %v177
    %v258 = vpop.f32.mrf.mxu0
    %v259 = vadd.f32 0.0, %v258
    %v260 = vpop.f32.mrf.mxu0
    %261 = vmatprep.mubr.f32.mxu0 0.0
    %262 = vmatmul.mubr.f32.gmra.mxu0 %v179
    %v263 = vpop.f32.mrf.mxu0
    %v264 = vadd.f32 0.0, %v263
    %v265 = vpop.f32.mrf.mxu0
    %266 = vdwg.mxu0
    %v267 = vmul.f32 %v254, 0.35355338
    %v268 = vmul.f32 %v259, 0.35355338
    %v269 = vmul.f32 %v264, 0.35355338
    %v270 = vadd.f32 %v267, %v54
    %v271 = vadd.f32 %v268, %v55
    %v272 = vadd.f32 %v269, %v56
    %vm273 = vcmask 195584
    %v274 = vsel %vm273, %v270, -inf
    %275 = vmax.xlane.f32.xlu0 %v274
    %v276 = vpop.xlane.xlu0 %275
    %v277 = vsel %vm273, %v271, -inf
    %278 = vmax.xlane.f32.xlu0 %v277
    %v279 = vpop.xlane.xlu0 %278
    %v280 = vsel %vm273, %v272, -inf
    %281 = vmax.xlane.f32.xlu0 %v280
    %v282 = vpop.xlane.xlu0 %281
    %v283 = vsub.f32 %v270, %v276
    %v284 = vsub.f32 %v271, %v279
    %v285 = vsub.f32 %v272, %v282
    %v286 = vmul.f32 %v283, 1.442695
    %v287 = vpow.pop %v286
    %v288 = vmul.f32 %v284, 1.442695
    %v289 = vpow.pop %v288
    %v290 = vmul.f32 %v285, 1.442695
    %v291 = vpow.pop %v290
    %v292 = vsel %vm273, %v287, 0.0
    %293 = vadd.xlane.f32.xlu0 %v292
    %v294 = vpop.xlane.xlu0 %293
    %v295 = vsel %vm273, %v289, 0.0
    %296 = vadd.xlane.f32.xlu0 %v295
    %v297 = vpop.xlane.xlu0 %296
    %v298 = vsel %vm273, %v291, 0.0
    %299 = vadd.xlane.f32.xlu0 %v298
    %v300 = vpop.xlane.xlu0 %299
    %v301 = vrcp.pop %v294
    %v302 = vrcp.pop %v297
    %v303 = vrcp.pop %v300
    %304 = vrot.lane.b32.xlu0 %v148, 64
    %v305 = vpop.permute.xlu0 %304
    %306 = vrot.lane.b32.xlu0 %v153, 64
    %v307 = vpop.permute.xlu0 %306
    %308 = vrot.lane.b32.xlu0 %v158, 64
    %v309 = vpop.permute.xlu0 %308
    %v314 = vsel %vm273, %v287, 0
    %v317 = vsel %vm273, %v289, 0
    %v320 = vsel %vm273, %v291, 0
    %322 = vmatprep.subr.mxu0 0.0
    %323 = vmatpush1.msra.mxu0 0.0
    %324 = vmatprep.subr.mxu0 0.0
    %325 = vmatpush1.msra.mxu0 0.0
    %326 = vmatprep.subr.mxu0 0.0
    %327 = vmatpush1.msra.mxu0 0.0
    %328 = vmatprep.subr.mxu0 0.0
    %329 = vmatpush1.msra.mxu0 0.0
    %330 = vmatprep.subr.mxu0 0.0
    %331 = vmatpush1.msra.mxu0 0.0
    %332 = vmatprep.subr.mxu0 0.0
    %333 = vmatpush1.msra.mxu0 0.0
    %334 = vmatprep.subr.mxu0 0.0
    %335 = vmatpush1.msra.mxu0 0.0
    %336 = vmatprep.subr.mxu0 0.0
    %337 = vmatpush1.msra.mxu0 0.0
    %338 = vmatprep.subr.mxu0 0.0
    %339 = vmatpush1.msra.mxu0 0.0
    %340 = vmatprep.subr.mxu0 0.0
    %341 = vmatpush1.msra.mxu0 0.0
    %342 = vmatprep.subr.mxu0 0.0
    %343 = vmatpush1.msra.mxu0 0.0
    %344 = vmatprep.subr.mxu0 0.0
    %345 = vmatpush1.msra.mxu0 0.0
    %346 = vmatprep.subr.mxu0 0.0
    %347 = vmatpush1.msra.mxu0 0.0
    %348 = vmatprep.subr.mxu0 0.0
    %349 = vmatpush1.msra.mxu0 %v309
    %350 = vmatprep.subr.mxu0 0.0
    %351 = vmatpush1.msra.mxu0 %v307
    %352 = vmatprep.subr.mxu0 0.0
    %353 = vmatpush1.msra.mxu0 %v305
    %354 = vmatprep.subr.mxu0 0.0
    %355 = vmatpush2.msra.mxu0 0.0
    %356 = vmatprep.subr.mxu0 0.0
    %357 = vmatpush2.msra.mxu0 0.0
    %358 = vmatprep.subr.mxu0 0.0
    %359 = vmatpush2.msra.mxu0 0.0
    %360 = vmatprep.subr.mxu0 0.0
    %361 = vmatpush2.msra.mxu0 0.0
    %362 = vmatprep.subr.mxu0 0.0
    %363 = vmatpush2.msra.mxu0 0.0
    %364 = vmatprep.subr.mxu0 0.0
    %365 = vmatpush2.msra.mxu0 0.0
    %366 = vmatprep.subr.mxu0 0.0
    %367 = vmatpush2.msra.mxu0 0.0
    %368 = vmatprep.subr.mxu0 0.0
    %369 = vmatpush2.msra.mxu0 0.0
    %370 = vmatprep.subr.mxu0 0.0
    %371 = vmatpush2.msra.mxu0 0.0
    %372 = vmatprep.subr.mxu0 0.0
    %373 = vmatpush2.msra.mxu0 0.0
    %374 = vmatprep.subr.mxu0 0.0
    %375 = vmatpush2.msra.mxu0 0.0
    %376 = vmatprep.subr.mxu0 0.0
    %377 = vmatpush2.msra.mxu0 0.0
    %378 = vmatprep.subr.mxu0 0.0
    %379 = vmatpush2.msra.mxu0 0.0
    %380 = vmatprep.subr.mxu0 0.0
    %381 = vmatpush2.msra.mxu0 0.0
    %382 = vmatprep.subr.mxu0 0.0
    %383 = vmatpush2.msra.mxu0 0.0
    %384 = vmatprep.subr.mxu0 0.0
    %385 = vmatpush2.msra.mxu0 0.0
    %386 = vmatprep.mubr.f32.mxu0 0.0
    %387 = vmatmul.mubr.f32.gmra.mxu0 %v314
    %v388 = vpop.f32.mrf.mxu0
    %v389 = vadd.f32 0.0, %v388
    %v390 = vpop.f32.mrf.mxu0
    %391 = vmatprep.mubr.f32.mxu0 0.0
    %392 = vmatmul.mubr.f32.gmra.mxu0 %v317
    %v393 = vpop.f32.mrf.mxu0
    %v394 = vadd.f32 0.0, %v393
    %v395 = vpop.f32.mrf.mxu0
    %396 = vmatprep.mubr.f32.mxu0 0.0
    %397 = vmatmul.mubr.f32.gmra.mxu0 %v320
    %v398 = vpop.f32.mrf.mxu0
    %v399 = vadd.f32 0.0, %v398
    %v400 = vpop.f32.mrf.mxu0
    %401 = vdwg.mxu0
    %v402 = vmul.f32 %v389, %v301
    %v403 = vmul.f32 %v394, %v302
    %v404 = vmul.f32 %v399, %v303
    %405 = vrot.lane.b32.xlu0 %v148, 120
    %v406 = vpop.permute.xlu0 %405
    %407 = vrot.lane.b32.xlu0 %v153, 120
    %v408 = vpop.permute.xlu0 %407
    %409 = vrot.lane.b32.xlu0 %v158, 120
    %v410 = vpop.permute.xlu0 %409
    %411 = vrot.lane.b32.xlu0 %v148, 88
    %v412 = vpop.permute.xlu0 %411
    %413 = vrot.lane.b32.xlu0 %v153, 88
    %v414 = vpop.permute.xlu0 %413
    %415 = vrot.lane.b32.xlu0 %v158, 88
    %v416 = vpop.permute.xlu0 %415
    %v417 = vsel %vm174, %v406, 0
    %v419 = vsel %vm174, %v408, 0
    %v421 = vsel %vm174, %v410, 0
    %v423 = vsel %vm174, %v412, 0
    %v425 = vsel %vm174, %v414, 0
    %v427 = vsel %vm174, %v416, 0
    %429 = vmatprep.subr.mxu0 0.0
    %430 = vmatpush1.xpose.msra.mxu0 0.0
    %431 = vmatprep.subr.mxu0 0.0
    %432 = vmatpush1.xpose.msra.mxu0 0.0
    %433 = vmatprep.subr.mxu0 0.0
    %434 = vmatpush1.xpose.msra.mxu0 0.0
    %435 = vmatprep.subr.mxu0 0.0
    %436 = vmatpush1.xpose.msra.mxu0 0.0
    %437 = vmatprep.subr.mxu0 0.0
    %438 = vmatpush1.xpose.msra.mxu0 0.0
    %439 = vmatprep.subr.mxu0 0.0
    %440 = vmatpush1.xpose.msra.mxu0 0.0
    %441 = vmatprep.subr.mxu0 0.0
    %442 = vmatpush1.xpose.msra.mxu0 0.0
    %443 = vmatprep.subr.mxu0 0.0
    %444 = vmatpush1.xpose.msra.mxu0 0.0
    %445 = vmatprep.subr.mxu0 0.0
    %446 = vmatpush1.xpose.msra.mxu0 0.0
    %447 = vmatprep.subr.mxu0 0.0
    %448 = vmatpush1.xpose.msra.mxu0 0.0
    %449 = vmatprep.subr.mxu0 0.0
    %450 = vmatpush1.xpose.msra.mxu0 0.0
    %451 = vmatprep.subr.mxu0 0.0
    %452 = vmatpush1.xpose.msra.mxu0 0.0
    %453 = vmatprep.subr.mxu0 0.0
    %454 = vmatpush1.xpose.msra.mxu0 0.0
    %455 = vmatprep.subr.mxu0 0.0
    %456 = vmatpush1.xpose.msra.mxu0 %v427
    %457 = vmatprep.subr.mxu0 0.0
    %458 = vmatpush1.xpose.msra.mxu0 %v425
    %459 = vmatprep.subr.mxu0 0.0
    %460 = vmatpush1.xpose.msra.mxu0 %v423
    %461 = vmatprep.subr.mxu0 0.0
    %462 = vmatpush2.xpose.msra.mxu0 0.0
    %463 = vmatprep.subr.mxu0 0.0
    %464 = vmatpush2.xpose.msra.mxu0 0.0
    %465 = vmatprep.subr.mxu0 0.0
    %466 = vmatpush2.xpose.msra.mxu0 0.0
    %467 = vmatprep.subr.mxu0 0.0
    %468 = vmatpush2.xpose.msra.mxu0 0.0
    %469 = vmatprep.subr.mxu0 0.0
    %470 = vmatpush2.xpose.msra.mxu0 0.0
    %471 = vmatprep.subr.mxu0 0.0
    %472 = vmatpush2.xpose.msra.mxu0 0.0
    %473 = vmatprep.subr.mxu0 0.0
    %474 = vmatpush2.xpose.msra.mxu0 0.0
    %475 = vmatprep.subr.mxu0 0.0
    %476 = vmatpush2.xpose.msra.mxu0 0.0
    %477 = vmatprep.subr.mxu0 0.0
    %478 = vmatpush2.xpose.msra.mxu0 0.0
    %479 = vmatprep.subr.mxu0 0.0
    %480 = vmatpush2.xpose.msra.mxu0 0.0
    %481 = vmatprep.subr.mxu0 0.0
    %482 = vmatpush2.xpose.msra.mxu0 0.0
    %483 = vmatprep.subr.mxu0 0.0
    %484 = vmatpush2.xpose.msra.mxu0 0.0
    %485 = vmatprep.subr.mxu0 0.0
    %486 = vmatpush2.xpose.msra.mxu0 0.0
    %487 = vmatprep.subr.mxu0 0.0
    %488 = vmatpush2.xpose.msra.mxu0 0.0
    %489 = vmatprep.subr.mxu0 0.0
    %490 = vmatpush2.xpose.msra.mxu0 0.0
    %491 = vmatprep.subr.mxu0 0.0
    %492 = vmatpush2.xpose.msra.mxu0 0.0
    %493 = vmatprep.mubr.f32.mxu0 0.0
    %494 = vmatmul.mubr.f32.gmra.mxu0 %v417
    %v495 = vpop.f32.mrf.mxu0
    %v496 = vadd.f32 0.0, %v495
    %v497 = vpop.f32.mrf.mxu0
    %498 = vmatprep.mubr.f32.mxu0 0.0
    %499 = vmatmul.mubr.f32.gmra.mxu0 %v419
    %v500 = vpop.f32.mrf.mxu0
    %v501 = vadd.f32 0.0, %v500
    %v502 = vpop.f32.mrf.mxu0
    %503 = vmatprep.mubr.f32.mxu0 0.0
    %504 = vmatmul.mubr.f32.gmra.mxu0 %v421
    %v505 = vpop.f32.mrf.mxu0
    %v506 = vadd.f32 0.0, %v505
    %v507 = vpop.f32.mrf.mxu0
    %508 = vdwg.mxu0
    %v509 = vmul.f32 %v496, 0.35355338
    %v510 = vmul.f32 %v501, 0.35355338
    %v511 = vmul.f32 %v506, 0.35355338
    %v512 = vadd.f32 %v509, %v54
    %v513 = vadd.f32 %v510, %v55
    %v514 = vadd.f32 %v511, %v56
    %v515 = vsel %vm273, %v512, -inf
    %516 = vmax.xlane.f32.xlu0 %v515
    %v517 = vpop.xlane.xlu0 %516
    %v518 = vsel %vm273, %v513, -inf
    %519 = vmax.xlane.f32.xlu0 %v518
    %v520 = vpop.xlane.xlu0 %519
    %v521 = vsel %vm273, %v514, -inf
    %522 = vmax.xlane.f32.xlu0 %v521
    %v523 = vpop.xlane.xlu0 %522
    %v524 = vsub.f32 %v512, %v517
    %v525 = vsub.f32 %v513, %v520
    %v526 = vsub.f32 %v514, %v523
    %v527 = vmul.f32 %v524, 1.442695
    %v528 = vpow.pop %v527
    %v529 = vmul.f32 %v525, 1.442695
    %v530 = vpow.pop %v529
    %v531 = vmul.f32 %v526, 1.442695
    %v532 = vpow.pop %v531
    %v533 = vsel %vm273, %v528, 0.0
    %534 = vadd.xlane.f32.xlu0 %v533
    %v535 = vpop.xlane.xlu0 %534
    %v536 = vsel %vm273, %v530, 0.0
    %537 = vadd.xlane.f32.xlu0 %v536
    %v538 = vpop.xlane.xlu0 %537
    %v539 = vsel %vm273, %v532, 0.0
    %540 = vadd.xlane.f32.xlu0 %v539
    %v541 = vpop.xlane.xlu0 %540
    %v542 = vrcp.pop %v535
    %v543 = vrcp.pop %v538
    %v544 = vrcp.pop %v541
    %545 = vrot.lane.b32.xlu0 %v148, 56
    %v546 = vpop.permute.xlu0 %545
    %547 = vrot.lane.b32.xlu0 %v153, 56
    %v548 = vpop.permute.xlu0 %547
    %549 = vrot.lane.b32.xlu0 %v158, 56
    %v550 = vpop.permute.xlu0 %549
    %v555 = vsel %vm273, %v528, 0
    %v558 = vsel %vm273, %v530, 0
    %v561 = vsel %vm273, %v532, 0
    %563 = vmatprep.subr.mxu0 0.0
    %564 = vmatpush1.msra.mxu0 0.0
    %565 = vmatprep.subr.mxu0 0.0
    %566 = vmatpush1.msra.mxu0 0.0
    %567 = vmatprep.subr.mxu0 0.0
    %568 = vmatpush1.msra.mxu0 0.0
    %569 = vmatprep.subr.mxu0 0.0
    %570 = vmatpush1.msra.mxu0 0.0
    %571 = vmatprep.subr.mxu0 0.0
    %572 = vmatpush1.msra.mxu0 0.0
    %573 = vmatprep.subr.mxu0 0.0
    %574 = vmatpush1.msra.mxu0 0.0
    %575 = vmatprep.subr.mxu0 0.0
    %576 = vmatpush1.msra.mxu0 0.0
    %577 = vmatprep.subr.mxu0 0.0
    %578 = vmatpush1.msra.mxu0 0.0
    %579 = vmatprep.subr.mxu0 0.0
    %580 = vmatpush1.msra.mxu0 0.0
    %581 = vmatprep.subr.mxu0 0.0
    %582 = vmatpush1.msra.mxu0 0.0
    %583 = vmatprep.subr.mxu0 0.0
    %584 = vmatpush1.msra.mxu0 0.0
    %585 = vmatprep.subr.mxu0 0.0
    %586 = vmatpush1.msra.mxu0 0.0
    %587 = vmatprep.subr.mxu0 0.0
    %588 = vmatpush1.msra.mxu0 0.0
    %589 = vmatprep.subr.mxu0 0.0
    %590 = vmatpush1.msra.mxu0 %v550
    %591 = vmatprep.subr.mxu0 0.0
    %592 = vmatpush1.msra.mxu0 %v548
    %593 = vmatprep.subr.mxu0 0.0
    %594 = vmatpush1.msra.mxu0 %v546
    %595 = vmatprep.subr.mxu0 0.0
    %596 = vmatpush2.msra.mxu0 0.0
    %597 = vmatprep.subr.mxu0 0.0
    %598 = vmatpush2.msra.mxu0 0.0
    %599 = vmatprep.subr.mxu0 0.0
    %600 = vmatpush2.msra.mxu0 0.0
    %601 = vmatprep.subr.mxu0 0.0
    %602 = vmatpush2.msra.mxu0 0.0
    %603 = vmatprep.subr.mxu0 0.0
    %604 = vmatpush2.msra.mxu0 0.0
    %605 = vmatprep.subr.mxu0 0.0
    %606 = vmatpush2.msra.mxu0 0.0
    %607 = vmatprep.subr.mxu0 0.0
    %608 = vmatpush2.msra.mxu0 0.0
    %609 = vmatprep.subr.mxu0 0.0
    %610 = vmatpush2.msra.mxu0 0.0
    %611 = vmatprep.subr.mxu0 0.0
    %612 = vmatpush2.msra.mxu0 0.0
    %613 = vmatprep.subr.mxu0 0.0
    %614 = vmatpush2.msra.mxu0 0.0
    %615 = vmatprep.subr.mxu0 0.0
    %616 = vmatpush2.msra.mxu0 0.0
    %617 = vmatprep.subr.mxu0 0.0
    %618 = vmatpush2.msra.mxu0 0.0
    %619 = vmatprep.subr.mxu0 0.0
    %620 = vmatpush2.msra.mxu0 0.0
    %621 = vmatprep.subr.mxu0 0.0
    %622 = vmatpush2.msra.mxu0 0.0
    %623 = vmatprep.subr.mxu0 0.0
    %624 = vmatpush2.msra.mxu0 0.0
    %625 = vmatprep.subr.mxu0 0.0
    %626 = vmatpush2.msra.mxu0 0.0
    %627 = vmatprep.mubr.f32.mxu0 0.0
    %628 = vmatmul.mubr.f32.gmra.mxu0 %v555
    %v629 = vpop.f32.mrf.mxu0
    %v630 = vadd.f32 0.0, %v629
    %v631 = vpop.f32.mrf.mxu0
    %632 = vmatprep.mubr.f32.mxu0 0.0
    %633 = vmatmul.mubr.f32.gmra.mxu0 %v558
    %v634 = vpop.f32.mrf.mxu0
    %v635 = vadd.f32 0.0, %v634
    %v636 = vpop.f32.mrf.mxu0
    %637 = vmatprep.mubr.f32.mxu0 0.0
    %638 = vmatmul.mubr.f32.gmra.mxu0 %v561
    %v639 = vpop.f32.mrf.mxu0
    %v640 = vadd.f32 0.0, %v639
    %v641 = vpop.f32.mrf.mxu0
    %642 = vdwg.mxu0
    %v643 = vmul.f32 %v630, %v542
    %v644 = vmul.f32 %v635, %v543
    %v645 = vmul.f32 %v640, %v544
    %v647 = vsel %vm174, %v643, 0
    %v650 = vsel %vm174, %v644, 0
    %v653 = vsel %vm174, %v645, 0
    %655 = vmatprep.subr.mxu0 0.0
    %656 = vmatpush1.msra.mxu0 0.0
    %657 = vmatprep.subr.mxu0 0.0
    %658 = vmatpush1.msra.mxu0 0.0
    %659 = vmatprep.subr.mxu0 0.0
    %660 = vmatpush1.msra.mxu0 0.0
    %661 = vmatprep.subr.mxu0 0.0
    %662 = vmatpush1.msra.mxu0 0.0
    %663 = vmatprep.subr.mxu0 0.0
    %664 = vmatpush1.msra.mxu0 0.0
    %665 = vmatprep.subr.mxu0 0.0
    %666 = vmatpush1.msra.mxu0 0.0
    %667 = vmatprep.subr.mxu0 0.0
    %668 = vmatpush1.msra.mxu0 0.0
    %669 = vmatprep.subr.mxu0 0.0
    %670 = vmatpush1.msra.mxu0 0.0
    %671 = vmatprep.subr.mxu0 0.0
    %672 = vmatpush1.msra.mxu0 0.0
    %673 = vmatprep.subr.mxu0 0.0
    %674 = vmatpush1.msra.mxu0 0.0
    %675 = vmatprep.subr.mxu0 0.0
    %676 = vmatpush1.msra.mxu0 0.0
    %677 = vmatprep.subr.mxu0 0.0
    %678 = vmatpush1.msra.mxu0 0.0
    %679 = vmatprep.subr.mxu0 0.0
    %680 = vmatpush1.msra.mxu0 0.0
    %681 = vmatprep.subr.mxu0 0.0
    %682 = vmatpush1.msra.mxu0 0.0
    %683 = vmatprep.subr.mxu0 0.0
    %684 = vmatpush1.msra.mxu0 0.0
    %685 = vmatprep.subr.mxu0 0.0
    %686 = vmatpush1.msra.mxu0 %v162
    %687 = vmatprep.subr.mxu0 0.0
    %688 = vmatpush2.msra.mxu0 0.0
    %689 = vmatprep.subr.mxu0 0.0
    %690 = vmatpush2.msra.mxu0 0.0
    %691 = vmatprep.subr.mxu0 0.0
    %692 = vmatpush2.msra.mxu0 0.0
    %693 = vmatprep.subr.mxu0 0.0
    %694 = vmatpush2.msra.mxu0 0.0
    %695 = vmatprep.subr.mxu0 0.0
    %696 = vmatpush2.msra.mxu0 0.0
    %697 = vmatprep.subr.mxu0 0.0
    %698 = vmatpush2.msra.mxu0 0.0
    %699 = vmatprep.subr.mxu0 0.0
    %700 = vmatpush2.msra.mxu0 0.0
    %701 = vmatprep.subr.mxu0 0.0
    %702 = vmatpush2.msra.mxu0 0.0
    %703 = vmatprep.subr.mxu0 0.0
    %704 = vmatpush2.msra.mxu0 0.0
    %705 = vmatprep.subr.mxu0 0.0
    %706 = vmatpush2.msra.mxu0 0.0
    %707 = vmatprep.subr.mxu0 0.0
    %708 = vmatpush2.msra.mxu0 0.0
    %709 = vmatprep.subr.mxu0 0.0
    %710 = vmatpush2.msra.mxu0 0.0
    %711 = vmatprep.subr.mxu0 0.0
    %712 = vmatpush2.msra.mxu0 0.0
    %713 = vmatprep.subr.mxu0 0.0
    %714 = vmatpush2.msra.mxu0 0.0
    %715 = vmatprep.subr.mxu0 0.0
    %716 = vmatpush2.msra.mxu0 0.0
    %717 = vmatprep.subr.mxu0 0.0
    %718 = vmatpush2.msra.mxu0 0.0
    %719 = vmatprep.mubr.f32.mxu0 0.0
    %720 = vmatmul.mubr.f32.gmra.mxu0 %v647
    %v721 = vpop.f32.mrf.mxu0
    %v722 = vadd.f32 0.0, %v721
    %v723 = vpop.f32.mrf.mxu0
    %724 = vmatprep.mubr.f32.mxu0 0.0
    %725 = vmatmul.mubr.f32.gmra.mxu0 %v650
    %v726 = vpop.f32.mrf.mxu0
    %v727 = vadd.f32 0.0, %v726
    %v728 = vpop.f32.mrf.mxu0
    %729 = vmatprep.mubr.f32.mxu0 0.0
    %730 = vmatmul.mubr.f32.gmra.mxu0 %v653
    %v731 = vpop.f32.mrf.mxu0
    %v732 = vadd.f32 0.0, %v731
    %v733 = vpop.f32.mrf.mxu0
    %734 = vdwg.mxu0
    %v736 = vsel %vm174, %v402, 0
    %v739 = vsel %vm174, %v403, 0
    %v742 = vsel %vm174, %v404, 0
    %744 = vmatprep.subr.mxu0 0.0
    %745 = vmatpush1.msra.mxu0 0.0
    %746 = vmatprep.subr.mxu0 0.0
    %747 = vmatpush1.msra.mxu0 0.0
    %748 = vmatprep.subr.mxu0 0.0
    %749 = vmatpush1.msra.mxu0 0.0
    %750 = vmatprep.subr.mxu0 0.0
    %751 = vmatpush1.msra.mxu0 0.0
    %752 = vmatprep.subr.mxu0 0.0
    %753 = vmatpush1.msra.mxu0 0.0
    %754 = vmatprep.subr.mxu0 0.0
    %755 = vmatpush1.msra.mxu0 0.0
    %756 = vmatprep.subr.mxu0 0.0
    %757 = vmatpush1.msra.mxu0 0.0
    %758 = vmatprep.subr.mxu0 0.0
    %759 = vmatpush1.msra.mxu0 0.0
    %760 = vmatprep.subr.mxu0 0.0
    %761 = vmatpush1.msra.mxu0 0.0
    %762 = vmatprep.subr.mxu0 0.0
    %763 = vmatpush1.msra.mxu0 0.0
    %764 = vmatprep.subr.mxu0 0.0
    %765 = vmatpush1.msra.mxu0 0.0
    %766 = vmatprep.subr.mxu0 0.0
    %767 = vmatpush1.msra.mxu0 0.0
    %768 = vmatprep.subr.mxu0 0.0
    %769 = vmatpush1.msra.mxu0 0.0
    %770 = vmatprep.subr.mxu0 0.0
    %771 = vmatpush1.msra.mxu0 0.0
    %772 = vmatprep.subr.mxu0 0.0
    %773 = vmatpush1.msra.mxu0 0.0
    %774 = vmatprep.subr.mxu0 0.0
    %775 = vmatpush1.msra.mxu0 %v161
    %776 = vmatprep.subr.mxu0 0.0
    %777 = vmatpush2.msra.mxu0 0.0
    %778 = vmatprep.subr.mxu0 0.0
    %779 = vmatpush2.msra.mxu0 0.0
    %780 = vmatprep.subr.mxu0 0.0
    %781 = vmatpush2.msra.mxu0 0.0
    %782 = vmatprep.subr.mxu0 0.0
    %783 = vmatpush2.msra.mxu0 0.0
    %784 = vmatprep.subr.mxu0 0.0
    %785 = vmatpush2.msra.mxu0 0.0
    %786 = vmatprep.subr.mxu0 0.0
    %787 = vmatpush2.msra.mxu0 0.0
    %788 = vmatprep.subr.mxu0 0.0
    %789 = vmatpush2.msra.mxu0 0.0
    %790 = vmatprep.subr.mxu0 0.0
    %791 = vmatpush2.msra.mxu0 0.0
    %792 = vmatprep.subr.mxu0 0.0
    %793 = vmatpush2.msra.mxu0 0.0
    %794 = vmatprep.subr.mxu0 0.0
    %795 = vmatpush2.msra.mxu0 0.0
    %796 = vmatprep.subr.mxu0 0.0
    %797 = vmatpush2.msra.mxu0 0.0
    %798 = vmatprep.subr.mxu0 0.0
    %799 = vmatpush2.msra.mxu0 0.0
    %800 = vmatprep.subr.mxu0 0.0
    %801 = vmatpush2.msra.mxu0 0.0
    %802 = vmatprep.subr.mxu0 0.0
    %803 = vmatpush2.msra.mxu0 0.0
    %804 = vmatprep.subr.mxu0 0.0
    %805 = vmatpush2.msra.mxu0 0.0
    %806 = vmatprep.subr.mxu0 0.0
    %807 = vmatpush2.msra.mxu0 0.0
    %808 = vmatprep.mubr.f32.mxu0 0.0
    %809 = vmatmul.mubr.f32.gmra.mxu0 %v736
    %v810 = vpop.f32.mrf.mxu0
    %v811 = vadd.f32 %v722, %v810
    %v812 = vpop.f32.mrf.mxu0
    %813 = vmatprep.mubr.f32.mxu0 0.0
    %814 = vmatmul.mubr.f32.gmra.mxu0 %v739
    %v815 = vpop.f32.mrf.mxu0
    %v816 = vadd.f32 %v727, %v815
    %v817 = vpop.f32.mrf.mxu0
    %818 = vmatprep.mubr.f32.mxu0 0.0
    %819 = vmatmul.mubr.f32.gmra.mxu0 %v742
    %v820 = vpop.f32.mrf.mxu0
    %v821 = vadd.f32 %v732, %v820
    %v822 = vpop.f32.mrf.mxu0
    %823 = vdwg.mxu0
    %824 = vrot.lane.b32.xlu0 %v148, 112
    %v825 = vpop.permute.xlu0 %824
    %826 = vrot.lane.b32.xlu0 %v153, 112
    %v827 = vpop.permute.xlu0 %826
    %828 = vrot.lane.b32.xlu0 %v158, 112
    %v829 = vpop.permute.xlu0 %828
    %830 = vrot.lane.b32.xlu0 %v148, 80
    %v831 = vpop.permute.xlu0 %830
    %832 = vrot.lane.b32.xlu0 %v153, 80
    %v833 = vpop.permute.xlu0 %832
    %834 = vrot.lane.b32.xlu0 %v158, 80
    %v835 = vpop.permute.xlu0 %834
    %v836 = vsel %vm174, %v825, 0
    %v838 = vsel %vm174, %v827, 0
    %v840 = vsel %vm174, %v829, 0
    %v842 = vsel %vm174, %v831, 0
    %v844 = vsel %vm174, %v833, 0
    %v846 = vsel %vm174, %v835, 0
    %848 = vmatprep.subr.mxu0 0.0
    %849 = vmatpush1.xpose.msra.mxu0 0.0
    %850 = vmatprep.subr.mxu0 0.0
    %851 = vmatpush1.xpose.msra.mxu0 0.0
    %852 = vmatprep.subr.mxu0 0.0
    %853 = vmatpush1.xpose.msra.mxu0 0.0
    %854 = vmatprep.subr.mxu0 0.0
    %855 = vmatpush1.xpose.msra.mxu0 0.0
    %856 = vmatprep.subr.mxu0 0.0
    %857 = vmatpush1.xpose.msra.mxu0 0.0
    %858 = vmatprep.subr.mxu0 0.0
    %859 = vmatpush1.xpose.msra.mxu0 0.0
    %860 = vmatprep.subr.mxu0 0.0
    %861 = vmatpush1.xpose.msra.mxu0 0.0
    %862 = vmatprep.subr.mxu0 0.0
    %863 = vmatpush1.xpose.msra.mxu0 0.0
    %864 = vmatprep.subr.mxu0 0.0
    %865 = vmatpush1.xpose.msra.mxu0 0.0
    %866 = vmatprep.subr.mxu0 0.0
    %867 = vmatpush1.xpose.msra.mxu0 0.0
    %868 = vmatprep.subr.mxu0 0.0
    %869 = vmatpush1.xpose.msra.mxu0 0.0
    %870 = vmatprep.subr.mxu0 0.0
    %871 = vmatpush1.xpose.msra.mxu0 0.0
    %872 = vmatprep.subr.mxu0 0.0
    %873 = vmatpush1.xpose.msra.mxu0 0.0
    %874 = vmatprep.subr.mxu0 0.0
    %875 = vmatpush1.xpose.msra.mxu0 %v846
    %876 = vmatprep.subr.mxu0 0.0
    %877 = vmatpush1.xpose.msra.mxu0 %v844
    %878 = vmatprep.subr.mxu0 0.0
    %879 = vmatpush1.xpose.msra.mxu0 %v842
    %880 = vmatprep.subr.mxu0 0.0
    %881 = vmatpush2.xpose.msra.mxu0 0.0
    %882 = vmatprep.subr.mxu0 0.0
    %883 = vmatpush2.xpose.msra.mxu0 0.0
    %884 = vmatprep.subr.mxu0 0.0
    %885 = vmatpush2.xpose.msra.mxu0 0.0
    %886 = vmatprep.subr.mxu0 0.0
    %887 = vmatpush2.xpose.msra.mxu0 0.0
    %888 = vmatprep.subr.mxu0 0.0
    %889 = vmatpush2.xpose.msra.mxu0 0.0
    %890 = vmatprep.subr.mxu0 0.0
    %891 = vmatpush2.xpose.msra.mxu0 0.0
    %892 = vmatprep.subr.mxu0 0.0
    %893 = vmatpush2.xpose.msra.mxu0 0.0
    %894 = vmatprep.subr.mxu0 0.0
    %895 = vmatpush2.xpose.msra.mxu0 0.0
    %896 = vmatprep.subr.mxu0 0.0
    %897 = vmatpush2.xpose.msra.mxu0 0.0
    %898 = vmatprep.subr.mxu0 0.0
    %899 = vmatpush2.xpose.msra.mxu0 0.0
    %900 = vmatprep.subr.mxu0 0.0
    %901 = vmatpush2.xpose.msra.mxu0 0.0
    %902 = vmatprep.subr.mxu0 0.0
    %903 = vmatpush2.xpose.msra.mxu0 0.0
    %904 = vmatprep.subr.mxu0 0.0
    %905 = vmatpush2.xpose.msra.mxu0 0.0
    %906 = vmatprep.subr.mxu0 0.0
    %907 = vmatpush2.xpose.msra.mxu0 0.0
    %908 = vmatprep.subr.mxu0 0.0
    %909 = vmatpush2.xpose.msra.mxu0 0.0
    %910 = vmatprep.subr.mxu0 0.0
    %911 = vmatpush2.xpose.msra.mxu0 0.0
    %912 = vmatprep.mubr.f32.mxu0 0.0
    %913 = vmatmul.mubr.f32.gmra.mxu0 %v836
    %v914 = vpop.f32.mrf.mxu0
    %v915 = vadd.f32 0.0, %v914
    %v916 = vpop.f32.mrf.mxu0
    %917 = vmatprep.mubr.f32.mxu0 0.0
    %918 = vmatmul.mubr.f32.gmra.mxu0 %v838
    %v919 = vpop.f32.mrf.mxu0
    %v920 = vadd.f32 0.0, %v919
    %v921 = vpop.f32.mrf.mxu0
    %922 = vmatprep.mubr.f32.mxu0 0.0
    %923 = vmatmul.mubr.f32.gmra.mxu0 %v840
    %v924 = vpop.f32.mrf.mxu0
    %v925 = vadd.f32 0.0, %v924
    %v926 = vpop.f32.mrf.mxu0
    %927 = vdwg.mxu0
    %v928 = vmul.f32 %v915, 0.35355338
    %v929 = vmul.f32 %v920, 0.35355338
    %v930 = vmul.f32 %v925, 0.35355338
    %v931 = vadd.f32 %v928, %v54
    %v932 = vadd.f32 %v929, %v55
    %v933 = vadd.f32 %v930, %v56
    %v934 = vsel %vm273, %v931, -inf
    %935 = vmax.xlane.f32.xlu0 %v934
    %v936 = vpop.xlane.xlu0 %935
    %v937 = vsel %vm273, %v932, -inf
    %938 = vmax.xlane.f32.xlu0 %v937
    %v939 = vpop.xlane.xlu0 %938
    %v940 = vsel %vm273, %v933, -inf
    %941 = vmax.xlane.f32.xlu0 %v940
    %v942 = vpop.xlane.xlu0 %941
    %v943 = vsub.f32 %v931, %v936
    %v944 = vsub.f32 %v932, %v939
    %v945 = vsub.f32 %v933, %v942
    %v946 = vmul.f32 %v943, 1.442695
    %v947 = vpow.pop %v946
    %v948 = vmul.f32 %v944, 1.442695
    %v949 = vpow.pop %v948
    %v950 = vmul.f32 %v945, 1.442695
    %v951 = vpow.pop %v950
    %v952 = vsel %vm273, %v947, 0.0
    %953 = vadd.xlane.f32.xlu0 %v952
    %v954 = vpop.xlane.xlu0 %953
    %v955 = vsel %vm273, %v949, 0.0
    %956 = vadd.xlane.f32.xlu0 %v955
    %v957 = vpop.xlane.xlu0 %956
    %v958 = vsel %vm273, %v951, 0.0
    %959 = vadd.xlane.f32.xlu0 %v958
    %v960 = vpop.xlane.xlu0 %959
    %v961 = vrcp.pop %v954
    %v962 = vrcp.pop %v957
    %v963 = vrcp.pop %v960
    %964 = vrot.lane.b32.xlu0 %v148, 48
    %v965 = vpop.permute.xlu0 %964
    %966 = vrot.lane.b32.xlu0 %v153, 48
    %v967 = vpop.permute.xlu0 %966
    %968 = vrot.lane.b32.xlu0 %v158, 48
    %v969 = vpop.permute.xlu0 %968
    %v974 = vsel %vm273, %v947, 0
    %v977 = vsel %vm273, %v949, 0
    %v980 = vsel %vm273, %v951, 0
    %982 = vmatprep.subr.mxu0 0.0
    %983 = vmatpush1.msra.mxu0 0.0
    %984 = vmatprep.subr.mxu0 0.0
    %985 = vmatpush1.msra.mxu0 0.0
    %986 = vmatprep.subr.mxu0 0.0
    %987 = vmatpush1.msra.mxu0 0.0
    %988 = vmatprep.subr.mxu0 0.0
    %989 = vmatpush1.msra.mxu0 0.0
    %990 = vmatprep.subr.mxu0 0.0
    %991 = vmatpush1.msra.mxu0 0.0
    %992 = vmatprep.subr.mxu0 0.0
    %993 = vmatpush1.msra.mxu0 0.0
    %994 = vmatprep.subr.mxu0 0.0
    %995 = vmatpush1.msra.mxu0 0.0
    %996 = vmatprep.subr.mxu0 0.0
    %997 = vmatpush1.msra.mxu0 0.0
    %998 = vmatprep.subr.mxu0 0.0
    %999 = vmatpush1.msra.mxu0 0.0
    %1000 = vmatprep.subr.mxu0 0.0
    %1001 = vmatpush1.msra.mxu0 0.0
    %1002 = vmatprep.subr.mxu0 0.0
    %1003 = vmatpush1.msra.mxu0 0.0
    %1004 = vmatprep.subr.mxu0 0.0
    %1005 = vmatpush1.msra.mxu0 0.0
    %1006 = vmatprep.subr.mxu0 0.0
    %1007 = vmatpush1.msra.mxu0 0.0
    %1008 = vmatprep.subr.mxu0 0.0
    %1009 = vmatpush1.msra.mxu0 %v969
    %1010 = vmatprep.subr.mxu0 0.0
    %1011 = vmatpush1.msra.mxu0 %v967
    %1012 = vmatprep.subr.mxu0 0.0
    %1013 = vmatpush1.msra.mxu0 %v965
    %1014 = vmatprep.subr.mxu0 0.0
    %1015 = vmatpush2.msra.mxu0 0.0
    %1016 = vmatprep.subr.mxu0 0.0
    %1017 = vmatpush2.msra.mxu0 0.0
    %1018 = vmatprep.subr.mxu0 0.0
    %1019 = vmatpush2.msra.mxu0 0.0
    %1020 = vmatprep.subr.mxu0 0.0
    %1021 = vmatpush2.msra.mxu0 0.0
    %1022 = vmatprep.subr.mxu0 0.0
    %1023 = vmatpush2.msra.mxu0 0.0
    %1024 = vmatprep.subr.mxu0 0.0
    %1025 = vmatpush2.msra.mxu0 0.0
    %1026 = vmatprep.subr.mxu0 0.0
    %1027 = vmatpush2.msra.mxu0 0.0
    %1028 = vmatprep.subr.mxu0 0.0
    %1029 = vmatpush2.msra.mxu0 0.0
    %1030 = vmatprep.subr.mxu0 0.0
    %1031 = vmatpush2.msra.mxu0 0.0
    %1032 = vmatprep.subr.mxu0 0.0
    %1033 = vmatpush2.msra.mxu0 0.0
    %1034 = vmatprep.subr.mxu0 0.0
    %1035 = vmatpush2.msra.mxu0 0.0
    %1036 = vmatprep.subr.mxu0 0.0
    %1037 = vmatpush2.msra.mxu0 0.0
    %1038 = vmatprep.subr.mxu0 0.0
    %1039 = vmatpush2.msra.mxu0 0.0
    %1040 = vmatprep.subr.mxu0 0.0
    %1041 = vmatpush2.msra.mxu0 0.0
    %1042 = vmatprep.subr.mxu0 0.0
    %1043 = vmatpush2.msra.mxu0 0.0
    %1044 = vmatprep.subr.mxu0 0.0
    %1045 = vmatpush2.msra.mxu0 0.0
    %1046 = vmatprep.mubr.f32.mxu0 0.0
    %1047 = vmatmul.mubr.f32.gmra.mxu0 %v974
    %v1048 = vpop.f32.mrf.mxu0
    %v1049 = vadd.f32 0.0, %v1048
    %v1050 = vpop.f32.mrf.mxu0
    %1051 = vmatprep.mubr.f32.mxu0 0.0
    %1052 = vmatmul.mubr.f32.gmra.mxu0 %v977
    %v1053 = vpop.f32.mrf.mxu0
    %v1054 = vadd.f32 0.0, %v1053
    %v1055 = vpop.f32.mrf.mxu0
    %1056 = vmatprep.mubr.f32.mxu0 0.0
    %1057 = vmatmul.mubr.f32.gmra.mxu0 %v980
    %v1058 = vpop.f32.mrf.mxu0
    %v1059 = vadd.f32 0.0, %v1058
    %v1060 = vpop.f32.mrf.mxu0
    %1061 = vdwg.mxu0
    %v1062 = vmul.f32 %v1049, %v961
    %v1063 = vmul.f32 %v1054, %v962
    %v1064 = vmul.f32 %v1059, %v963
    %v1066 = vsel %vm174, %v1062, 0
    %v1069 = vsel %vm174, %v1063, 0
    %v1072 = vsel %vm174, %v1064, 0
    %1074 = vmatprep.subr.mxu0 0.0
    %1075 = vmatpush1.msra.mxu0 0.0
    %1076 = vmatprep.subr.mxu0 0.0
    %1077 = vmatpush1.msra.mxu0 0.0
    %1078 = vmatprep.subr.mxu0 0.0
    %1079 = vmatpush1.msra.mxu0 0.0
    %1080 = vmatprep.subr.mxu0 0.0
    %1081 = vmatpush1.msra.mxu0 0.0
    %1082 = vmatprep.subr.mxu0 0.0
    %1083 = vmatpush1.msra.mxu0 0.0
    %1084 = vmatprep.subr.mxu0 0.0
    %1085 = vmatpush1.msra.mxu0 0.0
    %1086 = vmatprep.subr.mxu0 0.0
    %1087 = vmatpush1.msra.mxu0 0.0
    %1088 = vmatprep.subr.mxu0 0.0
    %1089 = vmatpush1.msra.mxu0 0.0
    %1090 = vmatprep.subr.mxu0 0.0
    %1091 = vmatpush1.msra.mxu0 0.0
    %1092 = vmatprep.subr.mxu0 0.0
    %1093 = vmatpush1.msra.mxu0 0.0
    %1094 = vmatprep.subr.mxu0 0.0
    %1095 = vmatpush1.msra.mxu0 0.0
    %1096 = vmatprep.subr.mxu0 0.0
    %1097 = vmatpush1.msra.mxu0 0.0
    %1098 = vmatprep.subr.mxu0 0.0
    %1099 = vmatpush1.msra.mxu0 0.0
    %1100 = vmatprep.subr.mxu0 0.0
    %1101 = vmatpush1.msra.mxu0 0.0
    %1102 = vmatprep.subr.mxu0 0.0
    %1103 = vmatpush1.msra.mxu0 0.0
    %1104 = vmatprep.subr.mxu0 0.0
    %1105 = vmatpush1.msra.mxu0 %v163
    %1106 = vmatprep.subr.mxu0 0.0
    %1107 = vmatpush2.msra.mxu0 0.0
    %1108 = vmatprep.subr.mxu0 0.0
    %1109 = vmatpush2.msra.mxu0 0.0
    %1110 = vmatprep.subr.mxu0 0.0
    %1111 = vmatpush2.msra.mxu0 0.0
    %1112 = vmatprep.subr.mxu0 0.0
    %1113 = vmatpush2.msra.mxu0 0.0
    %1114 = vmatprep.subr.mxu0 0.0
    %1115 = vmatpush2.msra.mxu0 0.0
    %1116 = vmatprep.subr.mxu0 0.0
    %1117 = vmatpush2.msra.mxu0 0.0
    %1118 = vmatprep.subr.mxu0 0.0
    %1119 = vmatpush2.msra.mxu0 0.0
    %1120 = vmatprep.subr.mxu0 0.0
    %1121 = vmatpush2.msra.mxu0 0.0
    %1122 = vmatprep.subr.mxu0 0.0
    %1123 = vmatpush2.msra.mxu0 0.0
    %1124 = vmatprep.subr.mxu0 0.0
    %1125 = vmatpush2.msra.mxu0 0.0
    %1126 = vmatprep.subr.mxu0 0.0
    %1127 = vmatpush2.msra.mxu0 0.0
    %1128 = vmatprep.subr.mxu0 0.0
    %1129 = vmatpush2.msra.mxu0 0.0
    %1130 = vmatprep.subr.mxu0 0.0
    %1131 = vmatpush2.msra.mxu0 0.0
    %1132 = vmatprep.subr.mxu0 0.0
    %1133 = vmatpush2.msra.mxu0 0.0
    %1134 = vmatprep.subr.mxu0 0.0
    %1135 = vmatpush2.msra.mxu0 0.0
    %1136 = vmatprep.subr.mxu0 0.0
    %1137 = vmatpush2.msra.mxu0 0.0
    %1138 = vmatprep.mubr.f32.mxu0 0.0
    %1139 = vmatmul.mubr.f32.gmra.mxu0 %v1066
    %v1140 = vpop.f32.mrf.mxu0
    %v1141 = vadd.f32 0.0, %v1140
    %v1142 = vpop.f32.mrf.mxu0
    %1143 = vmatprep.mubr.f32.mxu0 0.0
    %1144 = vmatmul.mubr.f32.gmra.mxu0 %v1069
    %v1145 = vpop.f32.mrf.mxu0
    %v1146 = vadd.f32 0.0, %v1145
    %v1147 = vpop.f32.mrf.mxu0
    %1148 = vmatprep.mubr.f32.mxu0 0.0
    %1149 = vmatmul.mubr.f32.gmra.mxu0 %v1072
    %v1150 = vpop.f32.mrf.mxu0
    %v1151 = vadd.f32 0.0, %v1150
    %v1152 = vpop.f32.mrf.mxu0
    %1153 = vdwg.mxu0
    %v1154 = vadd.f32 %v811, %v1141
    %v1155 = vadd.f32 %v816, %v1146
    %v1156 = vadd.f32 %v821, %v1151
    %1157 = vrot.lane.b32.xlu0 %v148, 104
    %v1158 = vpop.permute.xlu0 %1157
    %1159 = vrot.lane.b32.xlu0 %v153, 104
    %v1160 = vpop.permute.xlu0 %1159
    %1161 = vrot.lane.b32.xlu0 %v158, 104
    %v1162 = vpop.permute.xlu0 %1161
    %1163 = vrot.lane.b32.xlu0 %v148, 72
    %v1164 = vpop.permute.xlu0 %1163
    %1165 = vrot.lane.b32.xlu0 %v153, 72
    %v1166 = vpop.permute.xlu0 %1165
    %1167 = vrot.lane.b32.xlu0 %v158, 72
    %v1168 = vpop.permute.xlu0 %1167
    %v1169 = vsel %vm174, %v1158, 0
    %v1171 = vsel %vm174, %v1160, 0
    %v1173 = vsel %vm174, %v1162, 0
    %v1175 = vsel %vm174, %v1164, 0
    %v1177 = vsel %vm174, %v1166, 0
    %v1179 = vsel %vm174, %v1168, 0
    %1181 = vmatprep.subr.mxu0 0.0
    %1182 = vmatpush1.xpose.msra.mxu0 0.0
    %1183 = vmatprep.subr.mxu0 0.0
    %1184 = vmatpush1.xpose.msra.mxu0 0.0
    %1185 = vmatprep.subr.mxu0 0.0
    %1186 = vmatpush1.xpose.msra.mxu0 0.0
    %1187 = vmatprep.subr.mxu0 0.0
    %1188 = vmatpush1.xpose.msra.mxu0 0.0
    %1189 = vmatprep.subr.mxu0 0.0
    %1190 = vmatpush1.xpose.msra.mxu0 0.0
    %1191 = vmatprep.subr.mxu0 0.0
    %1192 = vmatpush1.xpose.msra.mxu0 0.0
    %1193 = vmatprep.subr.mxu0 0.0
    %1194 = vmatpush1.xpose.msra.mxu0 0.0
    %1195 = vmatprep.subr.mxu0 0.0
    %1196 = vmatpush1.xpose.msra.mxu0 0.0
    %1197 = vmatprep.subr.mxu0 0.0
    %1198 = vmatpush1.xpose.msra.mxu0 0.0
    %1199 = vmatprep.subr.mxu0 0.0
    %1200 = vmatpush1.xpose.msra.mxu0 0.0
    %1201 = vmatprep.subr.mxu0 0.0
    %1202 = vmatpush1.xpose.msra.mxu0 0.0
    %1203 = vmatprep.subr.mxu0 0.0
    %1204 = vmatpush1.xpose.msra.mxu0 0.0
    %1205 = vmatprep.subr.mxu0 0.0
    %1206 = vmatpush1.xpose.msra.mxu0 0.0
    %1207 = vmatprep.subr.mxu0 0.0
    %1208 = vmatpush1.xpose.msra.mxu0 %v1179
    %1209 = vmatprep.subr.mxu0 0.0
    %1210 = vmatpush1.xpose.msra.mxu0 %v1177
    %1211 = vmatprep.subr.mxu0 0.0
    %1212 = vmatpush1.xpose.msra.mxu0 %v1175
    %1213 = vmatprep.subr.mxu0 0.0
    %1214 = vmatpush2.xpose.msra.mxu0 0.0
    %1215 = vmatprep.subr.mxu0 0.0
    %1216 = vmatpush2.xpose.msra.mxu0 0.0
    %1217 = vmatprep.subr.mxu0 0.0
    %1218 = vmatpush2.xpose.msra.mxu0 0.0
    %1219 = vmatprep.subr.mxu0 0.0
    %1220 = vmatpush2.xpose.msra.mxu0 0.0
    %1221 = vmatprep.subr.mxu0 0.0
    %1222 = vmatpush2.xpose.msra.mxu0 0.0
    %1223 = vmatprep.subr.mxu0 0.0
    %1224 = vmatpush2.xpose.msra.mxu0 0.0
    %1225 = vmatprep.subr.mxu0 0.0
    %1226 = vmatpush2.xpose.msra.mxu0 0.0
    %1227 = vmatprep.subr.mxu0 0.0
    %1228 = vmatpush2.xpose.msra.mxu0 0.0
    %1229 = vmatprep.subr.mxu0 0.0
    %1230 = vmatpush2.xpose.msra.mxu0 0.0
    %1231 = vmatprep.subr.mxu0 0.0
    %1232 = vmatpush2.xpose.msra.mxu0 0.0
    %1233 = vmatprep.subr.mxu0 0.0
    %1234 = vmatpush2.xpose.msra.mxu0 0.0
    %1235 = vmatprep.subr.mxu0 0.0
    %1236 = vmatpush2.xpose.msra.mxu0 0.0
    %1237 = vmatprep.subr.mxu0 0.0
    %1238 = vmatpush2.xpose.msra.mxu0 0.0
    %1239 = vmatprep.subr.mxu0 0.0
    %1240 = vmatpush2.xpose.msra.mxu0 0.0
    %1241 = vmatprep.subr.mxu0 0.0
    %1242 = vmatpush2.xpose.msra.mxu0 0.0
    %1243 = vmatprep.subr.mxu0 0.0
    %1244 = vmatpush2.xpose.msra.mxu0 0.0
    %1245 = vmatprep.mubr.f32.mxu0 0.0
    %1246 = vmatmul.mubr.f32.gmra.mxu0 %v1169
    %v1247 = vpop.f32.mrf.mxu0
    %v1248 = vadd.f32 0.0, %v1247
    %v1249 = vpop.f32.mrf.mxu0
    %1250 = vmatprep.mubr.f32.mxu0 0.0
    %1251 = vmatmul.mubr.f32.gmra.mxu0 %v1171
    %v1252 = vpop.f32.mrf.mxu0
    %v1253 = vadd.f32 0.0, %v1252
    %v1254 = vpop.f32.mrf.mxu0
    %1255 = vmatprep.mubr.f32.mxu0 0.0
    %1256 = vmatmul.mubr.f32.gmra.mxu0 %v1173
    %v1257 = vpop.f32.mrf.mxu0
    %v1258 = vadd.f32 0.0, %v1257
    %v1259 = vpop.f32.mrf.mxu0
    %1260 = vdwg.mxu0
    %v1261 = vmul.f32 %v1248, 0.35355338
    %v1262 = vmul.f32 %v1253, 0.35355338
    %v1263 = vmul.f32 %v1258, 0.35355338
    %v1264 = vadd.f32 %v1261, %v54
    %v1265 = vadd.f32 %v1262, %v55
    %v1266 = vadd.f32 %v1263, %v56
    %v1267 = vsel %vm273, %v1264, -inf
    %1268 = vmax.xlane.f32.xlu0 %v1267
    %v1269 = vpop.xlane.xlu0 %1268
    %v1270 = vsel %vm273, %v1265, -inf
    %1271 = vmax.xlane.f32.xlu0 %v1270
    %v1272 = vpop.xlane.xlu0 %1271
    %v1273 = vsel %vm273, %v1266, -inf
    %1274 = vmax.xlane.f32.xlu0 %v1273
    %v1275 = vpop.xlane.xlu0 %1274
    %v1276 = vsub.f32 %v1264, %v1269
    %v1277 = vsub.f32 %v1265, %v1272
    %v1278 = vsub.f32 %v1266, %v1275
    %v1279 = vmul.f32 %v1276, 1.442695
    %v1280 = vpow.pop %v1279
    %v1281 = vmul.f32 %v1277, 1.442695
    %v1282 = vpow.pop %v1281
    %v1283 = vmul.f32 %v1278, 1.442695
    %v1284 = vpow.pop %v1283
    %v1285 = vsel %vm273, %v1280, 0.0
    %1286 = vadd.xlane.f32.xlu0 %v1285
    %v1287 = vpop.xlane.xlu0 %1286
    %v1288 = vsel %vm273, %v1282, 0.0
    %1289 = vadd.xlane.f32.xlu0 %v1288
    %v1290 = vpop.xlane.xlu0 %1289
    %v1291 = vsel %vm273, %v1284, 0.0
    %1292 = vadd.xlane.f32.xlu0 %v1291
    %v1293 = vpop.xlane.xlu0 %1292
    %v1294 = vrcp.pop %v1287
    %v1295 = vrcp.pop %v1290
    %v1296 = vrcp.pop %v1293
    %1297 = vrot.lane.b32.xlu0 %v148, 40
    %v1298 = vpop.permute.xlu0 %1297
    %1299 = vrot.lane.b32.xlu0 %v153, 40
    %v1300 = vpop.permute.xlu0 %1299
    %1301 = vrot.lane.b32.xlu0 %v158, 40
    %v1302 = vpop.permute.xlu0 %1301
    %v1307 = vsel %vm273, %v1280, 0
    %v1310 = vsel %vm273, %v1282, 0
    %v1313 = vsel %vm273, %v1284, 0
    %1315 = vmatprep.subr.mxu0 0.0
    %1316 = vmatpush1.msra.mxu0 0.0
    %1317 = vmatprep.subr.mxu0 0.0
    %1318 = vmatpush1.msra.mxu0 0.0
    %1319 = vmatprep.subr.mxu0 0.0
    %1320 = vmatpush1.msra.mxu0 0.0
    %1321 = vmatprep.subr.mxu0 0.0
    %1322 = vmatpush1.msra.mxu0 0.0
    %1323 = vmatprep.subr.mxu0 0.0
    %1324 = vmatpush1.msra.mxu0 0.0
    %1325 = vmatprep.subr.mxu0 0.0
    %1326 = vmatpush1.msra.mxu0 0.0
    %1327 = vmatprep.subr.mxu0 0.0
    %1328 = vmatpush1.msra.mxu0 0.0
    %1329 = vmatprep.subr.mxu0 0.0
    %1330 = vmatpush1.msra.mxu0 0.0
    %1331 = vmatprep.subr.mxu0 0.0
    %1332 = vmatpush1.msra.mxu0 0.0
    %1333 = vmatprep.subr.mxu0 0.0
    %1334 = vmatpush1.msra.mxu0 0.0
    %1335 = vmatprep.subr.mxu0 0.0
    %1336 = vmatpush1.msra.mxu0 0.0
    %1337 = vmatprep.subr.mxu0 0.0
    %1338 = vmatpush1.msra.mxu0 0.0
    %1339 = vmatprep.subr.mxu0 0.0
    %1340 = vmatpush1.msra.mxu0 0.0
    %1341 = vmatprep.subr.mxu0 0.0
    %1342 = vmatpush1.msra.mxu0 %v1302
    %1343 = vmatprep.subr.mxu0 0.0
    %1344 = vmatpush1.msra.mxu0 %v1300
    %1345 = vmatprep.subr.mxu0 0.0
    %1346 = vmatpush1.msra.mxu0 %v1298
    %1347 = vmatprep.subr.mxu0 0.0
    %1348 = vmatpush2.msra.mxu0 0.0
    %1349 = vmatprep.subr.mxu0 0.0
    %1350 = vmatpush2.msra.mxu0 0.0
    %1351 = vmatprep.subr.mxu0 0.0
    %1352 = vmatpush2.msra.mxu0 0.0
    %1353 = vmatprep.subr.mxu0 0.0
    %1354 = vmatpush2.msra.mxu0 0.0
    %1355 = vmatprep.subr.mxu0 0.0
    %1356 = vmatpush2.msra.mxu0 0.0
    %1357 = vmatprep.subr.mxu0 0.0
    %1358 = vmatpush2.msra.mxu0 0.0
    %1359 = vmatprep.subr.mxu0 0.0
    %1360 = vmatpush2.msra.mxu0 0.0
    %1361 = vmatprep.subr.mxu0 0.0
    %1362 = vmatpush2.msra.mxu0 0.0
    %1363 = vmatprep.subr.mxu0 0.0
    %1364 = vmatpush2.msra.mxu0 0.0
    %1365 = vmatprep.subr.mxu0 0.0
    %1366 = vmatpush2.msra.mxu0 0.0
    %1367 = vmatprep.subr.mxu0 0.0
    %1368 = vmatpush2.msra.mxu0 0.0
    %1369 = vmatprep.subr.mxu0 0.0
    %1370 = vmatpush2.msra.mxu0 0.0
    %1371 = vmatprep.subr.mxu0 0.0
    %1372 = vmatpush2.msra.mxu0 0.0
    %1373 = vmatprep.subr.mxu0 0.0
    %1374 = vmatpush2.msra.mxu0 0.0
    %1375 = vmatprep.subr.mxu0 0.0
    %1376 = vmatpush2.msra.mxu0 0.0
    %1377 = vmatprep.subr.mxu0 0.0
    %1378 = vmatpush2.msra.mxu0 0.0
    %1379 = vmatprep.mubr.f32.mxu0 0.0
    %1380 = vmatmul.mubr.f32.gmra.mxu0 %v1307
    %v1381 = vpop.f32.mrf.mxu0
    %v1382 = vadd.f32 0.0, %v1381
    %v1383 = vpop.f32.mrf.mxu0
    %1384 = vmatprep.mubr.f32.mxu0 0.0
    %1385 = vmatmul.mubr.f32.gmra.mxu0 %v1310
    %v1386 = vpop.f32.mrf.mxu0
    %v1387 = vadd.f32 0.0, %v1386
    %v1388 = vpop.f32.mrf.mxu0
    %1389 = vmatprep.mubr.f32.mxu0 0.0
    %1390 = vmatmul.mubr.f32.gmra.mxu0 %v1313
    %v1391 = vpop.f32.mrf.mxu0
    %v1392 = vadd.f32 0.0, %v1391
    %v1393 = vpop.f32.mrf.mxu0
    %1394 = vdwg.mxu0
    %v1395 = vmul.f32 %v1382, %v1294
    %v1396 = vmul.f32 %v1387, %v1295
    %v1397 = vmul.f32 %v1392, %v1296
    %v1399 = vsel %vm174, %v1395, 0
    %v1402 = vsel %vm174, %v1396, 0
    %v1405 = vsel %vm174, %v1397, 0
    %1407 = vmatprep.subr.mxu0 0.0
    %1408 = vmatpush1.msra.mxu0 0.0
    %1409 = vmatprep.subr.mxu0 0.0
    %1410 = vmatpush1.msra.mxu0 0.0
    %1411 = vmatprep.subr.mxu0 0.0
    %1412 = vmatpush1.msra.mxu0 0.0
    %1413 = vmatprep.subr.mxu0 0.0
    %1414 = vmatpush1.msra.mxu0 0.0
    %1415 = vmatprep.subr.mxu0 0.0
    %1416 = vmatpush1.msra.mxu0 0.0
    %1417 = vmatprep.subr.mxu0 0.0
    %1418 = vmatpush1.msra.mxu0 0.0
    %1419 = vmatprep.subr.mxu0 0.0
    %1420 = vmatpush1.msra.mxu0 0.0
    %1421 = vmatprep.subr.mxu0 0.0
    %1422 = vmatpush1.msra.mxu0 0.0
    %1423 = vmatprep.subr.mxu0 0.0
    %1424 = vmatpush1.msra.mxu0 0.0
    %1425 = vmatprep.subr.mxu0 0.0
    %1426 = vmatpush1.msra.mxu0 0.0
    %1427 = vmatprep.subr.mxu0 0.0
    %1428 = vmatpush1.msra.mxu0 0.0
    %1429 = vmatprep.subr.mxu0 0.0
    %1430 = vmatpush1.msra.mxu0 0.0
    %1431 = vmatprep.subr.mxu0 0.0
    %1432 = vmatpush1.msra.mxu0 0.0
    %1433 = vmatprep.subr.mxu0 0.0
    %1434 = vmatpush1.msra.mxu0 0.0
    %1435 = vmatprep.subr.mxu0 0.0
    %1436 = vmatpush1.msra.mxu0 0.0
    %1437 = vmatprep.subr.mxu0 0.0
    %1438 = vmatpush1.msra.mxu0 %v164
    %1439 = vmatprep.subr.mxu0 0.0
    %1440 = vmatpush2.msra.mxu0 0.0
    %1441 = vmatprep.subr.mxu0 0.0
    %1442 = vmatpush2.msra.mxu0 0.0
    %1443 = vmatprep.subr.mxu0 0.0
    %1444 = vmatpush2.msra.mxu0 0.0
    %1445 = vmatprep.subr.mxu0 0.0
    %1446 = vmatpush2.msra.mxu0 0.0
    %1447 = vmatprep.subr.mxu0 0.0
    %1448 = vmatpush2.msra.mxu0 0.0
    %1449 = vmatprep.subr.mxu0 0.0
    %1450 = vmatpush2.msra.mxu0 0.0
    %1451 = vmatprep.subr.mxu0 0.0
    %1452 = vmatpush2.msra.mxu0 0.0
    %1453 = vmatprep.subr.mxu0 0.0
    %1454 = vmatpush2.msra.mxu0 0.0
    %1455 = vmatprep.subr.mxu0 0.0
    %1456 = vmatpush2.msra.mxu0 0.0
    %1457 = vmatprep.subr.mxu0 0.0
    %1458 = vmatpush2.msra.mxu0 0.0
    %1459 = vmatprep.subr.mxu0 0.0
    %1460 = vmatpush2.msra.mxu0 0.0
    %1461 = vmatprep.subr.mxu0 0.0
    %1462 = vmatpush2.msra.mxu0 0.0
    %1463 = vmatprep.subr.mxu0 0.0
    %1464 = vmatpush2.msra.mxu0 0.0
    %1465 = vmatprep.subr.mxu0 0.0
    %1466 = vmatpush2.msra.mxu0 0.0
    %1467 = vmatprep.subr.mxu0 0.0
    %1468 = vmatpush2.msra.mxu0 0.0
    %1469 = vmatprep.subr.mxu0 0.0
    %1470 = vmatpush2.msra.mxu0 0.0
    %1471 = vmatprep.mubr.f32.mxu0 0.0
    %1472 = vmatmul.mubr.f32.gmra.mxu0 %v1399
    %v1473 = vpop.f32.mrf.mxu0
    %v1474 = vadd.f32 0.0, %v1473
    %v1475 = vpop.f32.mrf.mxu0
    %1476 = vmatprep.mubr.f32.mxu0 0.0
    %1477 = vmatmul.mubr.f32.gmra.mxu0 %v1402
    %v1478 = vpop.f32.mrf.mxu0
    %v1479 = vadd.f32 0.0, %v1478
    %v1480 = vpop.f32.mrf.mxu0
    %1481 = vmatprep.mubr.f32.mxu0 0.0
    %1482 = vmatmul.mubr.f32.gmra.mxu0 %v1405
    %v1483 = vpop.f32.mrf.mxu0
    %v1484 = vadd.f32 0.0, %v1483
    %v1485 = vpop.f32.mrf.mxu0
    %1486 = vdwg.mxu0
    %v1487 = vadd.f32 %v1154, %v1474
    %v1488 = vadd.f32 %v1155, %v1479
    %v1489 = vadd.f32 %v1156, %v1484
    %v1490 = vld [vmem:[%s6] sm:$0x1]
    %v1492 = vlaneseq
    %v1493 = vshrl.u32 %v1492, 7
    %v1494 = vsub.s32 0, %v1493
    %v1495 = vrot.slane %v1490, %v1494
    %v1497 = vadd.f32 %v1487, %v1495
    %v1498 = vadd.f32 %v1488, %v1495
    %v1499 = vadd.f32 %v1489, %v1495
    %1501 = vset.pattern.permute.xlu0 0
    %1502 = vperm.xlu0 %1501, %v57
    %v1503 = vpop.permute.xlu0 %1502
    %1506 = vset.pattern.permute.xlu0 0
    %1507 = vperm.xlu0 %1506, %v58
    %v1508 = vpop.permute.xlu0 %1507
    %1511 = vset.pattern.permute.xlu0 0
    %1512 = vperm.xlu0 %1511, %v59
    %v1513 = vpop.permute.xlu0 %1512
    %v1515 = vmul.f32 %v1497, %v1503
    %v1516 = vmul.f32 %v1498, %v1508
    %v1517 = vmul.f32 %v1499, %v1513
    %v1518 = vadd.f32 %v51, %v1515
    %v1519 = vadd.f32 %v52, %v1516
    %v1520 = vadd.f32 %v53, %v1517
    %v1521 = vsel %vm71, %v1518, 0.0
    %1522 = vadd.xlane.f32.xlu0 %v1521
    %v1523 = vpop.xlane.xlu0 %1522
    %v1524 = vsel %vm71, %v1519, 0.0
    %1525 = vadd.xlane.f32.xlu0 %v1524
    %v1526 = vpop.xlane.xlu0 %1525
    %v1527 = vsel %vm71, %v1520, 0.0
    %1528 = vadd.xlane.f32.xlu0 %v1527
    %v1529 = vpop.xlane.xlu0 %1528
    %v1530 = vrcp.pop 32.0
    %v1531 = vmul.f32 %v1523, %v1530
    %v1532 = vmul.f32 %v1526, %v1530
    %v1533 = vmul.f32 %v1529, %v1530
    %v1534 = vsub.f32 %v1518, %v1531
    %v1535 = vsub.f32 %v1519, %v1532
    %v1536 = vsub.f32 %v1520, %v1533
    %v1537 = vmul.f32 %v1534, %v1534
    %v1538 = vmul.f32 %v1535, %v1535
    %v1539 = vmul.f32 %v1536, %v1536
    %v1540 = vsel %vm71, %v1537, 0.0
    %1541 = vadd.xlane.f32.xlu0 %v1540
    %v1542 = vpop.xlane.xlu0 %1541
    %v1543 = vsel %vm71, %v1538, 0.0
    %1544 = vadd.xlane.f32.xlu0 %v1543
    %v1545 = vpop.xlane.xlu0 %1544
    %v1546 = vsel %vm71, %v1539, 0.0
    %1547 = vadd.xlane.f32.xlu0 %v1546
    %v1548 = vpop.xlane.xlu0 %1547
    %v1549 = vmul.f32 %v1542, %v1530
    %v1550 = vmul.f32 %v1545, %v1530
    %v1551 = vmul.f32 %v1548, %v1530
    %v1552 = vadd.f32 %v1549, 1e-05
    %v1553 = vadd.f32 %v1550, 1e-05
    %v1554 = vadd.f32 %v1551, 1e-05
    %v1555 = vrsqrt.pop %v1552
    %v1556 = vrsqrt.pop %v1553
    %v1557 = vrsqrt.pop %v1554
    %v1558 = vmul.f32 %v1534, %v1555
    %v1559 = vmul.f32 %v1535, %v1556
    %v1560 = vmul.f32 %v1536, %v1557
    %v1561 = vld [vmem:[%s7] sm:$0x1]
    %v1563 = vlaneseq
    %v1564 = vshrl.u32 %v1563, 7
    %v1565 = vsub.s32 0, %v1564
    %v1566 = vrot.slane %v1561, %v1565
    %v1568 = vmul.f32 %v1558, %v1566
    %v1569 = vmul.f32 %v1559, %v1566
    %v1570 = vmul.f32 %v1560, %v1566
    %v1571 = vld [vmem:[%s8] sm:$0x1]
    %v1573 = vlaneseq
    %v1574 = vshrl.u32 %v1573, 7
    %v1575 = vsub.s32 0, %v1574
    %v1576 = vrot.slane %v1571, %v1575
    %v1578 = vadd.f32 %v1568, %v1576
    %v1579 = vadd.f32 %v1569, %v1576
    %v1580 = vadd.f32 %v1570, %v1576
    %v1581 = vld [vmem:[%s9] sm:$0xff]
    %v1582 = vld [vmem:[%s9 + $0x8] sm:$0xff]
    %v1583 = vld [vmem:[%s9 + $0x10] sm:$0xff]
    %v1584 = vld [vmem:[%s9 + $0x18] sm:$0xff]
    %v1585 = vld [vmem:[%s10] sm:$0x1]
    %v1587 = vlaneseq
    %v1588 = vshrl.u32 %v1587, 7
    %v1589 = vsub.s32 0, %v1588
    %v1590 = vrot.slane %v1585, %v1589
    %v1593 = vsel %vm71, %v1578, 0
    %v1596 = vsel %vm71, %v1579, 0
    %v1599 = vsel %vm71, %v1580, 0
    %1601 = vmatprep.subr.mxu0 0.0
    %1602 = vmatpush1.msra.mxu0 0.0
    %1603 = vmatprep.subr.mxu0 0.0
    %1604 = vmatpush1.msra.mxu0 0.0
    %1605 = vmatprep.subr.mxu0 0.0
    %1606 = vmatpush1.msra.mxu0 0.0
    %1607 = vmatprep.subr.mxu0 0.0
    %1608 = vmatpush1.msra.mxu0 0.0
    %1609 = vmatprep.subr.mxu0 0.0
    %1610 = vmatpush1.msra.mxu0 0.0
    %1611 = vmatprep.subr.mxu0 0.0
    %1612 = vmatpush1.msra.mxu0 0.0
    %1613 = vmatprep.subr.mxu0 0.0
    %1614 = vmatpush1.msra.mxu0 0.0
    %1615 = vmatprep.subr.mxu0 0.0
    %1616 = vmatpush1.msra.mxu0 0.0
    %1617 = vmatprep.subr.mxu0 0.0
    %1618 = vmatpush1.msra.mxu0 0.0
    %1619 = vmatprep.subr.mxu0 0.0
    %1620 = vmatpush1.msra.mxu0 0.0
    %1621 = vmatprep.subr.mxu0 0.0
    %1622 = vmatpush1.msra.mxu0 0.0
    %1623 = vmatprep.subr.mxu0 0.0
    %1624 = vmatpush1.msra.mxu0 0.0
    %1625 = vmatprep.subr.mxu0 0.0
    %1626 = vmatpush1.msra.mxu0 %v1584
    %1627 = vmatprep.subr.mxu0 0.0
    %1628 = vmatpush1.msra.mxu0 %v1583
    %1629 = vmatprep.subr.mxu0 0.0
    %1630 = vmatpush1.msra.mxu0 %v1582
    %1631 = vmatprep.subr.mxu0 0.0
    %1632 = vmatpush1.msra.mxu0 %v1581
    %1633 = vmatprep.subr.mxu0 0.0
    %1634 = vmatpush2.msra.mxu0 0.0
    %1635 = vmatprep.subr.mxu0 0.0
    %1636 = vmatpush2.msra.mxu0 0.0
    %1637 = vmatprep.subr.mxu0 0.0
    %1638 = vmatpush2.msra.mxu0 0.0
    %1639 = vmatprep.subr.mxu0 0.0
    %1640 = vmatpush2.msra.mxu0 0.0
    %1641 = vmatprep.subr.mxu0 0.0
    %1642 = vmatpush2.msra.mxu0 0.0
    %1643 = vmatprep.subr.mxu0 0.0
    %1644 = vmatpush2.msra.mxu0 0.0
    %1645 = vmatprep.subr.mxu0 0.0
    %1646 = vmatpush2.msra.mxu0 0.0
    %1647 = vmatprep.subr.mxu0 0.0
    %1648 = vmatpush2.msra.mxu0 0.0
    %1649 = vmatprep.subr.mxu0 0.0
    %1650 = vmatpush2.msra.mxu0 0.0
    %1651 = vmatprep.subr.mxu0 0.0
    %1652 = vmatpush2.msra.mxu0 0.0
    %1653 = vmatprep.subr.mxu0 0.0
    %1654 = vmatpush2.msra.mxu0 0.0
    %1655 = vmatprep.subr.mxu0 0.0
    %1656 = vmatpush2.msra.mxu0 0.0
    %1657 = vmatprep.subr.mxu0 0.0
    %1658 = vmatpush2.msra.mxu0 0.0
    %1659 = vmatprep.subr.mxu0 0.0
    %1660 = vmatpush2.msra.mxu0 0.0
    %1661 = vmatprep.subr.mxu0 0.0
    %1662 = vmatpush2.msra.mxu0 0.0
    %1663 = vmatprep.subr.mxu0 0.0
    %1664 = vmatpush2.msra.mxu0 0.0
    %1665 = vmatprep.mubr.f32.mxu0 0.0
    %1666 = vmatmul.mubr.f32.gmra.mxu0 %v1593
    %v1667 = vpop.f32.mrf.mxu0
    %v1668 = vadd.f32 %v1590, %v1667
    %v1669 = vpop.f32.mrf.mxu0
    %1670 = vmatprep.mubr.f32.mxu0 0.0
    %1671 = vmatmul.mubr.f32.gmra.mxu0 %v1596
    %v1672 = vpop.f32.mrf.mxu0
    %v1673 = vadd.f32 %v1590, %v1672
    %v1674 = vpop.f32.mrf.mxu0
    %1675 = vmatprep.mubr.f32.mxu0 0.0
    %1676 = vmatmul.mubr.f32.gmra.mxu0 %v1599
    %v1677 = vpop.f32.mrf.mxu0
    %v1678 = vadd.f32 %v1590, %v1677
    %v1679 = vpop.f32.mrf.mxu0
    %1680 = vdwg.mxu0
    %v1681 = vmax.f32 %v1668, 0.0
    %v1682 = vmax.f32 %v1673, 0.0
    %v1683 = vmax.f32 %v1678, 0.0
    %v1684 = vld [vmem:[%s11] sm:$0xff]
    %v1685 = vld [vmem:[%s11 + $0x8] sm:$0xff]
    %v1686 = vld [vmem:[%s11 + $0x10] sm:$0xff]
    %v1687 = vld [vmem:[%s11 + $0x18] sm:$0xff]
    %v1688 = vld [vmem:[%s11 + $0x20] sm:$0xff]
    %v1689 = vld [vmem:[%s11 + $0x28] sm:$0xff]
    %v1690 = vld [vmem:[%s11 + $0x30] sm:$0xff]
    %v1691 = vld [vmem:[%s11 + $0x38] sm:$0xff]
    %v1692 = vld [vmem:[%s12] sm:$0x1]
    %v1694 = vlaneseq
    %v1695 = vshrl.u32 %v1694, 7
    %v1696 = vsub.s32 0, %v1695
    %v1697 = vrot.slane %v1692, %v1696
    %vm1699 = vcmask 523264
    %v1701 = vsel %vm1699, %v1681, 0
    %v1704 = vsel %vm1699, %v1682, 0
    %v1707 = vsel %vm1699, %v1683, 0
    %1709 = vmatprep.subr.mxu0 0.0
    %1710 = vmatpush1.msra.mxu0 0.0
    %1711 = vmatprep.subr.mxu0 0.0
    %1712 = vmatpush1.msra.mxu0 0.0
    %1713 = vmatprep.subr.mxu0 0.0
    %1714 = vmatpush1.msra.mxu0 0.0
    %1715 = vmatprep.subr.mxu0 0.0
    %1716 = vmatpush1.msra.mxu0 0.0
    %1717 = vmatprep.subr.mxu0 0.0
    %1718 = vmatpush1.msra.mxu0 0.0
    %1719 = vmatprep.subr.mxu0 0.0
    %1720 = vmatpush1.msra.mxu0 0.0
    %1721 = vmatprep.subr.mxu0 0.0
    %1722 = vmatpush1.msra.mxu0 0.0
    %1723 = vmatprep.subr.mxu0 0.0
    %1724 = vmatpush1.msra.mxu0 0.0
    %1725 = vmatprep.subr.mxu0 0.0
    %1726 = vmatpush1.msra.mxu0 %v1691
    %1727 = vmatprep.subr.mxu0 0.0
    %1728 = vmatpush1.msra.mxu0 %v1690
    %1729 = vmatprep.subr.mxu0 0.0
    %1730 = vmatpush1.msra.mxu0 %v1689
    %1731 = vmatprep.subr.mxu0 0.0
    %1732 = vmatpush1.msra.mxu0 %v1688
    %1733 = vmatprep.subr.mxu0 0.0
    %1734 = vmatpush1.msra.mxu0 %v1687
    %1735 = vmatprep.subr.mxu0 0.0
    %1736 = vmatpush1.msra.mxu0 %v1686
    %1737 = vmatprep.subr.mxu0 0.0
    %1738 = vmatpush1.msra.mxu0 %v1685
    %1739 = vmatprep.subr.mxu0 0.0
    %1740 = vmatpush1.msra.mxu0 %v1684
    %1741 = vmatprep.subr.mxu0 0.0
    %1742 = vmatpush2.msra.mxu0 0.0
    %1743 = vmatprep.subr.mxu0 0.0
    %1744 = vmatpush2.msra.mxu0 0.0
    %1745 = vmatprep.subr.mxu0 0.0
    %1746 = vmatpush2.msra.mxu0 0.0
    %1747 = vmatprep.subr.mxu0 0.0
    %1748 = vmatpush2.msra.mxu0 0.0
    %1749 = vmatprep.subr.mxu0 0.0
    %1750 = vmatpush2.msra.mxu0 0.0
    %1751 = vmatprep.subr.mxu0 0.0
    %1752 = vmatpush2.msra.mxu0 0.0
    %1753 = vmatprep.subr.mxu0 0.0
    %1754 = vmatpush2.msra.mxu0 0.0
    %1755 = vmatprep.subr.mxu0 0.0
    %1756 = vmatpush2.msra.mxu0 0.0
    %1757 = vmatprep.subr.mxu0 0.0
    %1758 = vmatpush2.msra.mxu0 0.0
    %1759 = vmatprep.subr.mxu0 0.0
    %1760 = vmatpush2.msra.mxu0 0.0
    %1761 = vmatprep.subr.mxu0 0.0
    %1762 = vmatpush2.msra.mxu0 0.0
    %1763 = vmatprep.subr.mxu0 0.0
    %1764 = vmatpush2.msra.mxu0 0.0
    %1765 = vmatprep.subr.mxu0 0.0
    %1766 = vmatpush2.msra.mxu0 0.0
    %1767 = vmatprep.subr.mxu0 0.0
    %1768 = vmatpush2.msra.mxu0 0.0
    %1769 = vmatprep.subr.mxu0 0.0
    %1770 = vmatpush2.msra.mxu0 0.0
    %1771 = vmatprep.subr.mxu0 0.0
    %1772 = vmatpush2.msra.mxu0 0.0
    %1773 = vmatprep.mubr.f32.mxu0 0.0
    %1774 = vmatmul.mubr.f32.gmra.mxu0 %v1701
    %v1775 = vpop.f32.mrf.mxu0
    %v1776 = vadd.f32 %v1697, %v1775
    %v1777 = vpop.f32.mrf.mxu0
    %1778 = vmatprep.mubr.f32.mxu0 0.0
    %1779 = vmatmul.mubr.f32.gmra.mxu0 %v1704
    %v1780 = vpop.f32.mrf.mxu0
    %v1781 = vadd.f32 %v1697, %v1780
    %v1782 = vpop.f32.mrf.mxu0
    %1783 = vmatprep.mubr.f32.mxu0 0.0
    %1784 = vmatmul.mubr.f32.gmra.mxu0 %v1707
    %v1785 = vpop.f32.mrf.mxu0
    %v1786 = vadd.f32 %v1697, %v1785
    %v1787 = vpop.f32.mrf.mxu0
    %1788 = vdwg.mxu0
    %v1789 = vadd.f32 %v1578, %v1776
    %v1790 = vadd.f32 %v1579, %v1781
    %v1791 = vadd.f32 %v1580, %v1786
    %v1792 = vsel %vm71, %v1789, 0.0
    %1793 = vadd.xlane.f32.xlu0 %v1792
    %v1794 = vpop.xlane.xlu0 %1793
    %v1795 = vsel %vm71, %v1790, 0.0
    %1796 = vadd.xlane.f32.xlu0 %v1795
    %v1797 = vpop.xlane.xlu0 %1796
    %v1798 = vsel %vm71, %v1791, 0.0
    %1799 = vadd.xlane.f32.xlu0 %v1798
    %v1800 = vpop.xlane.xlu0 %1799
    %v1801 = vmul.f32 %v1794, %v1530
    %v1802 = vmul.f32 %v1797, %v1530
    %v1803 = vmul.f32 %v1800, %v1530
    %v1804 = vsub.f32 %v1789, %v1801
    %v1805 = vsub.f32 %v1790, %v1802
    %v1806 = vsub.f32 %v1791, %v1803
    %v1807 = vmul.f32 %v1804, %v1804
    %v1808 = vmul.f32 %v1805, %v1805
    %v1809 = vmul.f32 %v1806, %v1806
    %v1810 = vsel %vm71, %v1807, 0.0
    %1811 = vadd.xlane.f32.xlu0 %v1810
    %v1812 = vpop.xlane.xlu0 %1811
    %v1813 = vsel %vm71, %v1808, 0.0
    %1814 = vadd.xlane.f32.xlu0 %v1813
    %v1815 = vpop.xlane.xlu0 %1814
    %v1816 = vsel %vm71, %v1809, 0.0
    %1817 = vadd.xlane.f32.xlu0 %v1816
    %v1818 = vpop.xlane.xlu0 %1817
    %v1819 = vmul.f32 %v1812, %v1530
    %v1820 = vmul.f32 %v1815, %v1530
    %v1821 = vmul.f32 %v1818, %v1530
    %v1822 = vadd.f32 %v1819, 1e-05
    %v1823 = vadd.f32 %v1820, 1e-05
    %v1824 = vadd.f32 %v1821, 1e-05
    %v1825 = vrsqrt.pop %v1822
    %v1826 = vrsqrt.pop %v1823
    %v1827 = vrsqrt.pop %v1824
    %v1828 = vmul.f32 %v1804, %v1825
    %v1829 = vmul.f32 %v1805, %v1826
    %v1830 = vmul.f32 %v1806, %v1827
    %v1831 = vld [vmem:[%s13] sm:$0x1]
    %v1833 = vlaneseq
    %v1834 = vshrl.u32 %v1833, 7
    %v1835 = vsub.s32 0, %v1834
    %v1836 = vrot.slane %v1831, %v1835
    %v1838 = vmul.f32 %v1828, %v1836
    %v1839 = vmul.f32 %v1829, %v1836
    %v1840 = vmul.f32 %v1830, %v1836
    %v1841 = vld [vmem:[%s14] sm:$0x1]
    %v1843 = vlaneseq
    %v1844 = vshrl.u32 %v1843, 7
    %v1845 = vsub.s32 0, %v1844
    %v1846 = vrot.slane %v1841, %v1845
    %v1848 = vadd.f32 %v1838, %v1846
    %v1849 = vadd.f32 %v1839, %v1846
    %v1850 = vadd.f32 %v1840, %v1846
    %1851 = vst.msk [vmem:[#allocation2] sm:$0xff] %vm71, %v1848
    %1852 = vst.msk [vmem:[#allocation2 + $0x8] sm:$0xff] %vm71, %v1849
    %1853 = vst.msk [vmem:[#allocation2 + $0x10] sm:$0xff] %vm71, %v1850
    // Predicated region
    $region62: #{hand_transformer_pallas.1} parent=1 // pred_check
      _
    $region63: #{hand_transformer_pallas.1} parent=1 // pred_check_branch
      %1855 = sbr.rel (0) target = $region65
    $region64: #{hand_transformer_pallas.1} parent=1 // pred_region
      %s1857 = ssub.s32 384, 384
      %1858 = vsyncadd [#allocation3], %s1857
      %s1859 = sshll.u32 [#allocation2], 4
      %s1860 = int_to_ptr.vmem [resolvable:$true] %s1859
      %1865 = dma.vmem_to_hbm [thread:$0]  %s1860, 384, %s15, [#allocation3], 128, 128, 8
    $region65: #{hand_transformer_pallas.1} parent=1 // pred_fallthru
      _
    // Predicated region
    $region66: #{hand_transformer_pallas.1} parent=1 // pred_check
      _
    $region67: #{hand_transformer_pallas.1} parent=1 // pred_check_branch
      %1867 = sbr.rel (0) target = $region69
    $region68: #{hand_transformer_pallas.1} parent=1 // pred_region
      %1868 = dma.done [#allocation3], 384
    $region69: #{hand_transformer_pallas.1} parent=1 // pred_fallthru
      _
    %1869 = vsyncpa [#allocation3], 1

</llo_original>
